<compile_context>
chip_gen: v7x
topology: tpu7x:2x2x1
jax: 0.10.0
libtpu: 0.0.40
codegen_flags: <defaults>
</compile_context>

<pallas_src>
import math

import jax
import jax.numpy as jnp
from jax.experimental import pallas as pl
from jax.experimental.pallas import tpu as pltpu

EPS = 1e-5
LANE = 128


def _round_up(x, m):
    return (x + m - 1) // m * m


def _vmem_limit_bytes():
    # v7x: 64 MiB physical VMEM per TensorCore; v5e/v6e: 128 MiB.
    try:
        kind = jax.devices()[0].device_kind.lower()
    except Exception:
        kind = ""
    return (48 if "v7" in kind else 96) * 1024 * 1024


# ---------------------------------------------------------------------------
# Fused Pallas kernel: one grid step == one residual layer.
# ---------------------------------------------------------------------------
def res_block_kernel(x_hbm, w1_ref, w2_ref, bn_ref, o_ref,
                     act_ref, pad_ref, dma_sem):
    """Refs:
      x_hbm  : (N, L+2p, Cin_pad) f32 HBM (memory_space=ANY), zero halo + chan pad.
      w1_ref : (k, Cin_pad, Cmid_pad) bf16 block of layer l (per-tap matrices).
      w2_ref : (k, Cmid_pad, Cin_pad) bf16 block of layer l.
      bn_ref : (1, 8, Cmid_pad) f32 block: rows 0..3 = gamma1, beta1, gamma2, beta2.
      o_ref  : (N, L, Cin_pad) f32 resident output block (written on last step).
      act_ref: (N, L+2p, Cin_pad) f32 VMEM activation carried across layers,
               halo rows permanently zero.
      pad_ref: (N, L+2p, Cmid_pad) f32 VMEM staging for conv2 input, halo zero.
      dma_sem: (1,) DMA semaphore for the single input copy.
    """
    l = pl.program_id(0)
    n, L, cinp = o_ref.shape
    k = w1_ref.shape[0]
    p = (k - 1) // 2
    cmidp = pad_ref.shape[-1]

    @pl.when(l == 0)
    def _init():
        # Halo rows are zeroed once and never written again.
        pad_ref[...] = jnp.zeros_like(pad_ref)
        # One manual DMA of the pre-padded NLC input into the persistent
        # activation buffer (no pipelined double-buffered input copies).
        cp = pltpu.make_async_copy(x_hbm, act_ref, dma_sem.at[0])
        cp.start()
        cp.wait()

    act = act_ref[...]                        # (N, L+2p, Cin_pad) f32, zero halos
    resid = act[:, p:p + L, :]                # (N, L, Cin_pad)

    bn = bn_ref[0]                            # (8, Cmid_pad) f32
    gamma1, beta1 = bn[0:1, :], bn[1:2, :]
    gamma2, beta2 = bn[2:3, :cinp], bn[3:4, :cinp]

    cnt = float(n * L)

    def conv_taps(src, w_ref, cout):
        """'same' Conv1d (bias-free) as k per-tap accumulating bf16 MXU matmuls.
        src: (N, L+2p, c) f32 value with zero halos; w_ref: (k, c, cout) bf16.
        Returns (N*L, cout) f32."""
        y = jnp.zeros((n * L, cout), jnp.float32)
        for t in range(k):                                      # static, small k
            a = src[:, t:t + L, :].reshape(n * L, -1).astype(jnp.bfloat16)
            y = y + jnp.dot(a, w_ref[t], preferred_element_type=jnp.float32)
        return y

    def bn_train(y, gamma, beta):
        """Training-mode BatchNorm1d over (N, L), biased variance, centered
        two-pass form.  The conv bias is omitted upstream because the mean
        subtraction cancels it exactly."""
        mean = jnp.sum(y, axis=0, keepdims=True) / cnt
        d = y - mean
        var = jnp.sum(d * d, axis=0, keepdims=True) / cnt
        return d * (gamma * jax.lax.rsqrt(var + EPS)) + beta

    # conv1 -> bn1 -> relu
    y1 = jnp.maximum(bn_train(conv_taps(act, w1_ref, cmidp), gamma1, beta1), 0.0)
    pad_ref[:, p:p + L, :] = y1.reshape(n, L, cmidp)
    # conv2 -> bn2 -> +x -> relu
    y2 = bn_train(conv_taps(pad_ref[...], w2_ref, cinp), gamma2, beta2)
    out = jnp.maximum(y2.reshape(n, L, cinp) + resid, 0.0)
    act_ref[:, p:p + L, :] = out              # carry to next layer, halos untouched

    @pl.when(l == pl.num_programs(0) - 1)
    def _finalize():
        o_ref[...] = out


# ---------------------------------------------------------------------------
# Parameters: torch-layout init + one-time conversion to kernel layout
# ---------------------------------------------------------------------------
def init_res_conv1d_block(key, in_channels, out_channels, kernel_size, layer_num):
    """Torch-layout params matching the PyTorch module (uniform Conv init,
    BN gamma=1 / beta=0).  conv weight: (Cout, Cin, k); bias: (Cout,)."""
    assert kernel_size % 2 == 1, "padding=(k-1)//2 reproduces 'same' only for odd k"
    params = []
    cmid = 2 * in_channels
    for _ in range(layer_num):
        key, k1, k2, k3, k4 = jax.random.split(key, 5)
        bound1 = 1.0 / math.sqrt(in_channels * kernel_size)
        w1 = jax.random.uniform(k1, (cmid, in_channels, kernel_size),
                                jnp.float32, -bound1, bound1)
        b1 = jax.random.uniform(k2, (cmid,), jnp.float32, -bound1, bound1)
        bound2 = 1.0 / math.sqrt(cmid * kernel_size)
        w2 = jax.random.uniform(k3, (out_channels, cmid, kernel_size),
                                jnp.float32, -bound2, bound2)
        b2 = jax.random.uniform(k4, (out_channels,), jnp.float32, -bound2, bound2)
        params.append((w1, b1,
                       jnp.ones((cmid,), jnp.float32), jnp.zeros((cmid,), jnp.float32),
                       w2, b2,
                       jnp.ones((out_channels,), jnp.float32),
                       jnp.zeros((out_channels,), jnp.float32)))
    return params


def pack_params(params):
    """One-time conversion to kernel layout.  Conv biases are intentionally
    dropped (training-mode BN cancels them exactly).  Channels are zero-padded
    to the 128-lane boundary; gamma/beta padding is zero so padded channels
    stay exactly zero through the whole stack.

    Returns (w1, w2, bn):
      w1: (layer_num*k, Cin_pad, Cmid_pad) bf16   per-tap matrices
      w2: (layer_num*k, Cmid_pad, Cin_pad) bf16
      bn: (layer_num, 8, Cmid_pad) f32   rows 0..3 = gamma1, beta1, gamma2, beta2
    """
    layer_num = len(params)
    cmid, cin, k = params[0][0].shape          # conv1 weight (2*Cin, Cin, k)
    cout = params[0][4].shape[0]
    assert cout == cin, "residual add requires out_channels == in_channels"
    cinp, cmidp = _round_up(cin, LANE), _round_up(cmid, LANE)

    w1 = jnp.zeros((layer_num, k, cinp, cmidp), jnp.float32)
    w2 = jnp.zeros((layer_num, k, cmidp, cinp), jnp.float32)
    bn = jnp.zeros((layer_num, 8, cmidp), jnp.float32)
    for i, (w1t, _b1, g1, be1, w2t, _b2, g2, be2) in enumerate(params):
        w1 = w1.at[i, :, :cin, :cmid].set(jnp.transpose(w1t, (2, 1, 0)))
        w2 = w2.at[i, :, :cmid, :cout].set(jnp.transpose(w2t, (2, 1, 0)))
        bn = bn.at[i, 0, :cmid].set(g1)
        bn = bn.at[i, 1, :cmid].set(be1)
        bn = bn.at[i, 2, :cout].set(g2)
        bn = bn.at[i, 3, :cout].set(be2)
    w1 = w1.reshape(layer_num * k, cinp, cmidp).astype(jnp.bfloat16)
    w2 = w2.reshape(layer_num * k, cmidp, cinp).astype(jnp.bfloat16)
    return w1, w2, bn


@jax.jit
def res_conv1d_block_forward(x_ncl, packed):
    """x_ncl: (N, C, L) NCW input, stride == 1 (as in the PyTorch module)."""
    w1, w2, bn = packed
    layer_num = bn.shape[0]
    k = w1.shape[0] // layer_num
    cinp, cmidp = w1.shape[1], w1.shape[2]
    n, c, L = x_ncl.shape
    p = (k - 1) // 2
    assert _round_up(c, LANE) == cinp, "packed params built for a different C"

    # Layout plumbing in XLA (fuses for free): NCW -> NLC, zero-pad channels to
    # the lane boundary, and add the zero halo rows the kernel relies on.
    x_nlc = jnp.transpose(x_ncl, (0, 2, 1)).astype(jnp.float32)
    x_pad = jnp.zeros((n, L + 2 * p, cinp), jnp.float32)
    x_pad = x_pad.at[:, p:p + L, :c].set(x_nlc)

    grid_spec = pltpu.PrefetchScalarGridSpec(
        num_scalar_prefetch=0,
        grid=(layer_num,),
        in_specs=[
            pl.BlockSpec(memory_space=pl.ANY),                     # x: manual DMA
            pl.BlockSpec((k, cinp, cmidp), lambda l: (l, 0, 0)),   # w1[l] taps
            pl.BlockSpec((k, cmidp, cinp), lambda l: (l, 0, 0)),   # w2[l] taps
            pl.BlockSpec((1, 8, cmidp), lambda l: (l, 0, 0)),      # bn params[l]
        ],
        out_specs=pl.BlockSpec((n, L, cinp), lambda l: (0, 0, 0)),
        scratch_shapes=[
            pltpu.VMEM((n, L + 2 * p, cinp), jnp.float32),    # resident activation
            pltpu.VMEM((n, L + 2 * p, cmidp), jnp.float32),   # conv2 staging
            pltpu.SemaphoreType.DMA((1,)),
        ],
    )
    out_pad = pl.pallas_call(
        res_block_kernel,
        out_shape=jax.ShapeDtypeStruct((n, L, cinp), jnp.float32),
        grid_spec=grid_spec,
        compiler_params=pltpu.CompilerParams(
            dimension_semantics=("arbitrary",),      # layers are sequential
            vmem_limit_bytes=_vmem_limit_bytes(),
        ),
    )(x_pad, w1, w2, bn)

    # NLC -> NCW, drop the channel padding.
    return jnp.transpose(out_pad[:, :, :c], (0, 2, 1)).astype(x_ncl.dtype)


# ---------------------------------------------------------------------------
# Plain-JAX f32 reference (independent of the kernel) for verification
# ---------------------------------------------------------------------------
def _ref_forward(x, params):
    def conv(x, w, b):
        p = (w.shape[2] - 1) // 2
        y = jax.lax.conv_general_dilated(
            x, w, window_strides=(1,), padding=[(p, p)],
            dimension_numbers=("NCH", "OIH", "NCH"))
        return y + b[None, :, None]

    def bn(y, g, be):
        mean = jnp.mean(y, axis=(0, 2), keepdims=True)
        var = jnp.mean(jnp.square(y - mean), axis=(0, 2), keepdims=True)
        return (y - mean) * jax.lax.rsqrt(var + EPS) * g[None, :, None] + be[None, :, None]

    for (w1, b1, g1, be1, w2, b2, g2, be2) in params:
        tmp = jax.nn.relu(bn(conv(x, w1, b1), g1, be1))
        x = jax.nn.relu(bn(conv(tmp, w2, b2), g2, be2) + x)
    return x


if __name__ == "__main__":
    # Small config consistent with the module: in_channels == out_channels
    # (required by the residual), kernel_size=3, stride=1, layer_num=2;
    # input (N, C, L) = (2, 4, 16).
    N, C, L = 2, 4, 16
    kernel_size, layer_num = 3, 2

    key = jax.random.PRNGKey(0)
    kx, kp = jax.random.split(key)
    x = jax.random.normal(kx, (N, C, L), jnp.float32)
    params = init_res_conv1d_block(kp, C, C, kernel_size, layer_num)
    packed = pack_params(params)            # kernel-layout conversion done once

    out = jax.block_until_ready(res_conv1d_block_forward(x, packed))

    ref = jax.block_until_ready(_ref_forward(x, params))
    assert out.shape == (N, C, L)
    err = float(jnp.max(jnp.abs(out - ref)))
    # bf16 MXU operands vs f32 reference; BN renormalizes, so the deviation
    # stays small but above strict f32 tolerances.
    assert err < 5e-2, f"max err {err}"

    print("KERNEL_OK")
</pallas_src>

<mosaic_0001>
module attributes {stable_mosaic.version = 11 : i64} {
  func.func @res_block_kernel(%arg0: i32, %arg1: memref<2x18x128xf32, #tpu.memory_space<any>>, %arg2: memref<3x128x128xbf16, #tpu.memory_space<vmem>>, %arg3: memref<3x128x128xbf16, #tpu.memory_space<vmem>>, %arg4: memref<1x8x128xf32, #tpu.memory_space<vmem>>, %arg5: memref<2x16x128xf32, #tpu.memory_space<vmem>>, %arg6: memref<2x18x128xf32, #tpu.memory_space<vmem>>, %arg7: memref<2x18x128xf32, #tpu.memory_space<vmem>>, %arg8: memref<1x!tpu.dma_semaphore, #tpu.memory_space<semaphore_mem>>) attributes {dimension_semantics = [#tpu.dimension_semantics<arbitrary>], iteration_bounds = array<i64: 2>, scalar_prefetch = 0 : i64, scratch_operands = 3 : i64, tpu.core_type = #tpu.core_type<tc>, window_params = [{}, {transform_indices = @transform_1, window_bounds = array<i64: 3, 128, 128>}, {transform_indices = @transform_2, window_bounds = array<i64: 3, 128, 128>}, {transform_indices = @transform_3, window_bounds = array<i64: 1, 8, 128>}, {pipeline_mode = #tpu.pipeline_mode<synchronous>, transform_indices = @transform_4, window_bounds = array<i64: 2, 16, 128>}]} {
    %c0_i32 = arith.constant 0 : i32
    %0 = arith.cmpi eq, %arg0, %c0_i32 : i32
    %1 = arith.extui %0 : i1 to i32
    %c0_i32_0 = arith.constant 0 : i32
    %2 = arith.cmpi ne, %1, %c0_i32_0 : i32
    scf.if %2 {
      %cst_51 = arith.constant 0.000000e+00 : f32
      %106 = vector.broadcast %cst_51 : f32 to vector<2x18x128xf32>
      %c0_52 = arith.constant 0 : index
      %c0_53 = arith.constant 0 : index
      %c0_54 = arith.constant 0 : index
      %107 = vector.load %arg7[%c0_52, %c0_53, %c0_54] : memref<2x18x128xf32, #tpu.memory_space<vmem>>, vector<2x18x128xf32>
      tpu.vector_store %arg7[%c0_52, %c0_53, %c0_54], %106 {strides = array<i32>} : memref<2x18x128xf32, #tpu.memory_space<vmem>>, vector<2x18x128xf32>,
      %c0_i32_55 = arith.constant 0 : i32
      %108 = tpu.memref_slice %arg8[%c0_i32_55] : memref<1x!tpu.dma_semaphore, #tpu.memory_space<semaphore_mem>> -> memref<1x!tpu.dma_semaphore, #tpu.memory_space<semaphore_mem>>
      %109 = tpu.memref_squeeze %108 : memref<1x!tpu.dma_semaphore, #tpu.memory_space<semaphore_mem>> -> memref<!tpu.dma_semaphore, #tpu.memory_space<semaphore_mem>>
      tpu.enqueue_dma source(%arg1 : memref<2x18x128xf32, #tpu.memory_space<any>>) target(%arg6 : memref<2x18x128xf32, #tpu.memory_space<vmem>>) target_semaphore(%109 : memref<!tpu.dma_semaphore, #tpu.memory_space<semaphore_mem>>)
      %c0_i32_56 = arith.constant 0 : i32
      %110 = tpu.memref_slice %arg8[%c0_i32_56] : memref<1x!tpu.dma_semaphore, #tpu.memory_space<semaphore_mem>> -> memref<1x!tpu.dma_semaphore, #tpu.memory_space<semaphore_mem>>
      %111 = tpu.memref_squeeze %110 : memref<1x!tpu.dma_semaphore, #tpu.memory_space<semaphore_mem>> -> memref<!tpu.dma_semaphore, #tpu.memory_space<semaphore_mem>>
      tpu.wait_dma2 semaphore(%111 : memref<!tpu.dma_semaphore, #tpu.memory_space<semaphore_mem>>) src(%arg1 : memref<2x18x128xf32, #tpu.memory_space<any>>) dst(%arg6 : memref<2x18x128xf32, #tpu.memory_space<vmem>>)
    } else {
    }
    %c0 = arith.constant 0 : index
    %c0_1 = arith.constant 0 : index
    %c0_2 = arith.constant 0 : index
    %3 = vector.load %arg6[%c0, %c0_1, %c0_2] : memref<2x18x128xf32, #tpu.memory_space<vmem>>, vector<2x18x128xf32>
    %4 = vector.extract_strided_slice %3 {offsets = [0, 1, 0], sizes = [2, 16, 128], strides = [1, 1, 1]} : vector<2x18x128xf32> to vector<2x16x128xf32>
    %c0_3 = arith.constant 0 : index
    %c0_4 = arith.constant 0 : index
    %c0_5 = arith.constant 0 : index
    %5 = vector.load %arg4[%c0_3, %c0_4, %c0_5] : memref<1x8x128xf32, #tpu.memory_space<vmem>>, vector<1x8x128xf32>
    %6 = vector.shape_cast %5 : vector<1x8x128xf32> to vector<8x128xf32>
    %7 = vector.extract_strided_slice %6 {offsets = [0, 0], sizes = [1, 128], strides = [1, 1]} : vector<8x128xf32> to vector<1x128xf32>
    %8 = vector.extract_strided_slice %6 {offsets = [1, 0], sizes = [1, 128], strides = [1, 1]} : vector<8x128xf32> to vector<1x128xf32>
    %9 = vector.extract_strided_slice %6 {offsets = [2, 0], sizes = [1, 128], strides = [1, 1]} : vector<8x128xf32> to vector<1x128xf32>
    %10 = vector.extract_strided_slice %6 {offsets = [3, 0], sizes = [1, 128], strides = [1, 1]} : vector<8x128xf32> to vector<1x128xf32>
    %cst = arith.constant 0.000000e+00 : f32
    %11 = vector.broadcast %cst : f32 to vector<32x128xf32>
    %12 = vector.extract_strided_slice %3 {offsets = [0, 0, 0], sizes = [2, 16, 128], strides = [1, 1, 1]} : vector<2x18x128xf32> to vector<2x16x128xf32>
    %13 = vector.shape_cast %12 : vector<2x16x128xf32> to vector<32x128xf32>
    %14 = arith.truncf %13 : vector<32x128xf32> to vector<32x128xbf16>
    %c0_6 = arith.constant 0 : index
    %c0_7 = arith.constant 0 : index
    %c0_8 = arith.constant 0 : index
    %15 = vector.load %arg2[%c0_6, %c0_7, %c0_8] : memref<3x128x128xbf16, #tpu.memory_space<vmem>>, vector<1x128x128xbf16>
    %16 = vector.shape_cast %15 : vector<1x128x128xbf16> to vector<128x128xbf16>
    %cst_9 = arith.constant dense<0.000000e+00> : vector<32x128xf32>
    %17 = tpu.matmul %14, %16, %cst_9 {dimension_numbers = #tpu.dot_dimension_numbers<[1], [0], [0], [1], [0, 0, 1, 1], [], []>} : vector<32x128xbf16>, vector<128x128xbf16>, vector<32x128xf32> -> vector<32x128xf32>
    %18 = arith.addf %11, %17 : vector<32x128xf32>
    %19 = vector.extract_strided_slice %3 {offsets = [0, 1, 0], sizes = [2, 16, 128], strides = [1, 1, 1]} : vector<2x18x128xf32> to vector<2x16x128xf32>
    %20 = vector.shape_cast %19 : vector<2x16x128xf32> to vector<32x128xf32>
    %21 = arith.truncf %20 : vector<32x128xf32> to vector<32x128xbf16>
    %c1 = arith.constant 1 : index
    %c0_10 = arith.constant 0 : index
    %c0_11 = arith.constant 0 : index
    %22 = vector.load %arg2[%c1, %c0_10, %c0_11] : memref<3x128x128xbf16, #tpu.memory_space<vmem>>, vector<1x128x128xbf16>
    %23 = vector.shape_cast %22 : vector<1x128x128xbf16> to vector<128x128xbf16>
    %cst_12 = arith.constant dense<0.000000e+00> : vector<32x128xf32>
    %24 = tpu.matmul %21, %23, %cst_12 {dimension_numbers = #tpu.dot_dimension_numbers<[1], [0], [0], [1], [0, 0, 1, 1], [], []>} : vector<32x128xbf16>, vector<128x128xbf16>, vector<32x128xf32> -> vector<32x128xf32>
    %25 = arith.addf %18, %24 : vector<32x128xf32>
    %26 = vector.extract_strided_slice %3 {offsets = [0, 2, 0], sizes = [2, 16, 128], strides = [1, 1, 1]} : vector<2x18x128xf32> to vector<2x16x128xf32>
    %27 = vector.shape_cast %26 : vector<2x16x128xf32> to vector<32x128xf32>
    %28 = arith.truncf %27 : vector<32x128xf32> to vector<32x128xbf16>
    %c2 = arith.constant 2 : index
    %c0_13 = arith.constant 0 : index
    %c0_14 = arith.constant 0 : index
    %29 = vector.load %arg2[%c2, %c0_13, %c0_14] : memref<3x128x128xbf16, #tpu.memory_space<vmem>>, vector<1x128x128xbf16>
    %30 = vector.shape_cast %29 : vector<1x128x128xbf16> to vector<128x128xbf16>
    %cst_15 = arith.constant dense<0.000000e+00> : vector<32x128xf32>
    %31 = tpu.matmul %28, %30, %cst_15 {dimension_numbers = #tpu.dot_dimension_numbers<[1], [0], [0], [1], [0, 0, 1, 1], [], []>} : vector<32x128xbf16>, vector<128x128xbf16>, vector<32x128xf32> -> vector<32x128xf32>
    %32 = arith.addf %25, %31 : vector<32x128xf32>
    %cst_16 = arith.constant dense<0.000000e+00> : vector<128xf32>
    %33 = vector.multi_reduction <add>, %32, %cst_16 [0] : vector<32x128xf32> to vector<128xf32>
    %34 = vector.shape_cast %33 : vector<128xf32> to vector<1x128xf32>
    %cst_17 = arith.constant 3.200000e+01 : f32
    %35 = vector.broadcast %cst_17 : f32 to vector<1x128xf32>
    %36 = arith.divf %34, %35 : vector<1x128xf32>
    %37 = vector.broadcast %36 : vector<1x128xf32> to vector<32x128xf32>
    %38 = arith.subf %32, %37 : vector<32x128xf32>
    %39 = arith.mulf %38, %38 : vector<32x128xf32>
    %cst_18 = arith.constant dense<0.000000e+00> : vector<128xf32>
    %40 = vector.multi_reduction <add>, %39, %cst_18 [0] : vector<32x128xf32> to vector<128xf32>
    %41 = vector.shape_cast %40 : vector<128xf32> to vector<1x128xf32>
    %cst_19 = arith.constant 3.200000e+01 : f32
    %42 = vector.broadcast %cst_19 : f32 to vector<1x128xf32>
    %43 = arith.divf %41, %42 : vector<1x128xf32>
    %cst_20 = arith.constant 9.99999974E-6 : f32
    %44 = vector.broadcast %cst_20 : f32 to vector<1x128xf32>
    %45 = arith.addf %43, %44 : vector<1x128xf32>
    %46 = math.rsqrt %45 : vector<1x128xf32>
    %47 = arith.mulf %7, %46 : vector<1x128xf32>
    %48 = vector.broadcast %47 : vector<1x128xf32> to vector<32x128xf32>
    %49 = arith.mulf %38, %48 : vector<32x128xf32>
    %50 = vector.broadcast %8 : vector<1x128xf32> to vector<32x128xf32>
    %51 = arith.addf %49, %50 : vector<32x128xf32>
    %cst_21 = arith.constant 0.000000e+00 : f32
    %52 = vector.broadcast %cst_21 : f32 to vector<32x128xf32>
    %53 = arith.maximumf %51, %52 : vector<32x128xf32>
    %54 = vector.shape_cast %53 : vector<32x128xf32> to vector<2x16x128xf32>
    %c0_22 = arith.constant 0 : index
    %c1_23 = arith.constant 1 : index
    %c0_24 = arith.constant 0 : index
    %55 = vector.load %arg7[%c0_22, %c1_23, %c0_24] : memref<2x18x128xf32, #tpu.memory_space<vmem>>, vector<2x16x128xf32>
    tpu.vector_store %arg7[%c0_22, %c1_23, %c0_24], %54 {strides = array<i32>} : memref<2x18x128xf32, #tpu.memory_space<vmem>>, vector<2x16x128xf32>,
    %c0_25 = arith.constant 0 : index
    %c0_26 = arith.constant 0 : index
    %c0_27 = arith.constant 0 : index
    %56 = vector.load %arg7[%c0_25, %c0_26, %c0_27] : memref<2x18x128xf32, #tpu.memory_space<vmem>>, vector<2x18x128xf32>
    %cst_28 = arith.constant 0.000000e+00 : f32
    %57 = vector.broadcast %cst_28 : f32 to vector<32x128xf32>
    %58 = vector.extract_strided_slice %56 {offsets = [0, 0, 0], sizes = [2, 16, 128], strides = [1, 1, 1]} : vector<2x18x128xf32> to vector<2x16x128xf32>
    %59 = vector.shape_cast %58 : vector<2x16x128xf32> to vector<32x128xf32>
    %60 = arith.truncf %59 : vector<32x128xf32> to vector<32x128xbf16>
    %c0_29 = arith.constant 0 : index
    %c0_30 = arith.constant 0 : index
    %c0_31 = arith.constant 0 : index
    %61 = vector.load %arg3[%c0_29, %c0_30, %c0_31] : memref<3x128x128xbf16, #tpu.memory_space<vmem>>, vector<1x128x128xbf16>
    %62 = vector.shape_cast %61 : vector<1x128x128xbf16> to vector<128x128xbf16>
    %cst_32 = arith.constant dense<0.000000e+00> : vector<32x128xf32>
    %63 = tpu.matmul %60, %62, %cst_32 {dimension_numbers = #tpu.dot_dimension_numbers<[1], [0], [0], [1], [0, 0, 1, 1], [], []>} : vector<32x128xbf16>, vector<128x128xbf16>, vector<32x128xf32> -> vector<32x128xf32>
    %64 = arith.addf %57, %63 : vector<32x128xf32>
    %65 = vector.extract_strided_slice %56 {offsets = [0, 1, 0], sizes = [2, 16, 128], strides = [1, 1, 1]} : vector<2x18x128xf32> to vector<2x16x128xf32>
    %66 = vector.shape_cast %65 : vector<2x16x128xf32> to vector<32x128xf32>
    %67 = arith.truncf %66 : vector<32x128xf32> to vector<32x128xbf16>
    %c1_33 = arith.constant 1 : index
    %c0_34 = arith.constant 0 : index
    %c0_35 = arith.constant 0 : index
    %68 = vector.load %arg3[%c1_33, %c0_34, %c0_35] : memref<3x128x128xbf16, #tpu.memory_space<vmem>>, vector<1x128x128xbf16>
    %69 = vector.shape_cast %68 : vector<1x128x128xbf16> to vector<128x128xbf16>
    %cst_36 = arith.constant dense<0.000000e+00> : vector<32x128xf32>
    %70 = tpu.matmul %67, %69, %cst_36 {dimension_numbers = #tpu.dot_dimension_numbers<[1], [0], [0], [1], [0, 0, 1, 1], [], []>} : vector<32x128xbf16>, vector<128x128xbf16>, vector<32x128xf32> -> vector<32x128xf32>
    %71 = arith.addf %64, %70 : vector<32x128xf32>
    %72 = vector.extract_strided_slice %56 {offsets = [0, 2, 0], sizes = [2, 16, 128], strides = [1, 1, 1]} : vector<2x18x128xf32> to vector<2x16x128xf32>
    %73 = vector.shape_cast %72 : vector<2x16x128xf32> to vector<32x128xf32>
    %74 = arith.truncf %73 : vector<32x128xf32> to vector<32x128xbf16>
    %c2_37 = arith.constant 2 : index
    %c0_38 = arith.constant 0 : index
    %c0_39 = arith.constant 0 : index
    %75 = vector.load %arg3[%c2_37, %c0_38, %c0_39] : memref<3x128x128xbf16, #tpu.memory_space<vmem>>, vector<1x128x128xbf16>
    %76 = vector.shape_cast %75 : vector<1x128x128xbf16> to vector<128x128xbf16>
    %cst_40 = arith.constant dense<0.000000e+00> : vector<32x128xf32>
    %77 = tpu.matmul %74, %76, %cst_40 {dimension_numbers = #tpu.dot_dimension_numbers<[1], [0], [0], [1], [0, 0, 1, 1], [], []>} : vector<32x128xbf16>, vector<128x128xbf16>, vector<32x128xf32> -> vector<32x128xf32>
    %78 = arith.addf %71, %77 : vector<32x128xf32>
    %cst_41 = arith.constant dense<0.000000e+00> : vector<128xf32>
    %79 = vector.multi_reduction <add>, %78, %cst_41 [0] : vector<32x128xf32> to vector<128xf32>
    %80 = vector.shape_cast %79 : vector<128xf32> to vector<1x128xf32>
    %cst_42 = arith.constant 3.200000e+01 : f32
    %81 = vector.broadcast %cst_42 : f32 to vector<1x128xf32>
    %82 = arith.divf %80, %81 : vector<1x128xf32>
    %83 = vector.broadcast %82 : vector<1x128xf32> to vector<32x128xf32>
    %84 = arith.subf %78, %83 : vector<32x128xf32>
    %85 = arith.mulf %84, %84 : vector<32x128xf32>
    %cst_43 = arith.constant dense<0.000000e+00> : vector<128xf32>
    %86 = vector.multi_reduction <add>, %85, %cst_43 [0] : vector<32x128xf32> to vector<128xf32>
    %87 = vector.shape_cast %86 : vector<128xf32> to vector<1x128xf32>
    %cst_44 = arith.constant 3.200000e+01 : f32
    %88 = vector.broadcast %cst_44 : f32 to vector<1x128xf32>
    %89 = arith.divf %87, %88 : vector<1x128xf32>
    %cst_45 = arith.constant 9.99999974E-6 : f32
    %90 = vector.broadcast %cst_45 : f32 to vector<1x128xf32>
    %91 = arith.addf %89, %90 : vector<1x128xf32>
    %92 = math.rsqrt %91 : vector<1x128xf32>
    %93 = arith.mulf %9, %92 : vector<1x128xf32>
    %94 = vector.broadcast %93 : vector<1x128xf32> to vector<32x128xf32>
    %95 = arith.mulf %84, %94 : vector<32x128xf32>
    %96 = vector.broadcast %10 : vector<1x128xf32> to vector<32x128xf32>
    %97 = arith.addf %95, %96 : vector<32x128xf32>
    %98 = vector.shape_cast %97 : vector<32x128xf32> to vector<2x16x128xf32>
    %99 = arith.addf %98, %4 : vector<2x16x128xf32>
    %cst_46 = arith.constant 0.000000e+00 : f32
    %100 = vector.broadcast %cst_46 : f32 to vector<2x16x128xf32>
    %101 = arith.maximumf %99, %100 : vector<2x16x128xf32>
    %c0_47 = arith.constant 0 : index
    %c1_48 = arith.constant 1 : index
    %c0_49 = arith.constant 0 : index
    %102 = vector.load %arg6[%c0_47, %c1_48, %c0_49] : memref<2x18x128xf32, #tpu.memory_space<vmem>>, vector<2x16x128xf32>
    tpu.vector_store %arg6[%c0_47, %c1_48, %c0_49], %101 {strides = array<i32>} : memref<2x18x128xf32, #tpu.memory_space<vmem>>, vector<2x16x128xf32>,
    %c1_i32 = arith.constant 1 : i32
    %103 = arith.cmpi eq, %arg0, %c1_i32 : i32
    %104 = arith.extui %103 : i1 to i32
    %c0_i32_50 = arith.constant 0 : i32
    %105 = arith.cmpi ne, %104, %c0_i32_50 : i32
    scf.if %105 {
      %c0_51 = arith.constant 0 : index
      %c0_52 = arith.constant 0 : index
      %c0_53 = arith.constant 0 : index
      %106 = vector.load %arg5[%c0_51, %c0_52, %c0_53] : memref<2x16x128xf32, #tpu.memory_space<vmem>>, vector<2x16x128xf32>
      tpu.vector_store %arg5[%c0_51, %c0_52, %c0_53], %101 {strides = array<i32>} : memref<2x16x128xf32, #tpu.memory_space<vmem>>, vector<2x16x128xf32>,
    } else {
    }
    return
  }
  func.func @transform_1(%arg0: i32) -> (i32, i32, i32) {
    %c0_i32 = arith.constant 0 : i32
    %c0_i32_0 = arith.constant 0 : i32
    %c0_i32_1 = arith.constant 0 : i32
    return %arg0, %c0_i32, %c0_i32_0 : i32, i32, i32
  }
  func.func @transform_2(%arg0: i32) -> (i32, i32, i32) {
    %c0_i32 = arith.constant 0 : i32
    %c0_i32_0 = arith.constant 0 : i32
    %c0_i32_1 = arith.constant 0 : i32
    return %arg0, %c0_i32, %c0_i32_0 : i32, i32, i32
  }
  func.func @transform_3(%arg0: i32) -> (i32, i32, i32) {
    %c0_i32 = arith.constant 0 : i32
    %c0_i32_0 = arith.constant 0 : i32
    %c0_i32_1 = arith.constant 0 : i32
    return %arg0, %c0_i32, %c0_i32_0 : i32, i32, i32
  }
  func.func @transform_4(%arg0: i32) -> (i32, i32, i32) {
    %c0_i32 = arith.constant 0 : i32
    %c0_i32_0 = arith.constant 0 : i32
    %c0_i32_1 = arith.constant 0 : i32
    %c0_i32_2 = arith.constant 0 : i32
    return %c0_i32, %c0_i32_0, %c0_i32_1 : i32, i32, i32
  }
}

</mosaic_0001>

<llo_original>
// kernel: res_conv1d_block_forward.1
$region0: #{res_conv1d_block_forward.1}
  #allocation0 [shape = 'u32[]', space=smem, size = 0x4, offset = 0x4, fixed_abs, tag = 'smem constant byte address 0x4 - core index']
  #allocation1 [shape = 'u32[144,128]{1,0:T(1,128)}', space=vmem, size = 0x12000, scoped, tag = 'internal scratch']
  #allocation2 [shape = 'f32[2,18,128]{2,1,0:T(8,128)}', space=vmem, size = 0x6000, scoped, tag = 'scratch operand']
  #allocation3 [shape = 'f32[2,18,128]{2,1,0:T(8,128)}', space=vmem, size = 0x6000, scoped, tag = 'scratch operand']
  #allocation4 [shape = 's32[1]{0}', space=sflag, size = 0x4, scoped, tag = 'scratch operand']
  #allocation12 [shape = 's32[]', space=sflag, size = 0x4, offset = 0, fixed_abs, tag = 'sflag constant byte address 0x0 - dummy sync flag']
  %s0 = inlined_call_operand.hbm [shape: f32[2,18,128], index: 0, kind: input, shape index: {}]
  %s1 = inlined_call_operand.hbm [shape: bf16[6,128,128], index: 1, kind: input, shape index: {}]
  %s2 = inlined_call_operand.hbm [shape: bf16[6,128,128], index: 2, kind: input, shape index: {}]
  %s3 = inlined_call_operand.hbm [shape: f32[2,8,128], index: 3, kind: input, shape index: {}]
  %s4 = inlined_call_operand.hbm [shape: f32[2,16,128], index: 4, kind: output, shape index: {}]
  %s5 = sld [smem:[#allocation0]]
  $region65: #{res_conv1d_block_forward.1} parent=0
    _
  %s7 = ssub.s32 1, %s5
  %s8 = scalar_select 0, %s7, %s5
  $region1: #{res_conv1d_block_forward.1} parent=0
    #allocation5 [shape = 'u8[196608]{0}', space=vmem, size = 0x30000, scoped, tag = 'input window, operand 1']
    #allocation6 [shape = 's32[2]{0}', space=sflag, size = 0x8, scoped, tag = 'scoped memory for res_conv1d_block_forward.1']
    #allocation7 [shape = 's32[2]{0}', space=sflag, size = 0x8, scoped, tag = 'scoped memory for res_conv1d_block_forward.1']
    #allocation8 [shape = 'u8[196608]{0}', space=vmem, size = 0x30000, scoped, tag = 'input window, operand 2']
    #allocation9 [shape = 's32[2]{0}', space=sflag, size = 0x8, scoped, tag = 'scoped memory for res_conv1d_block_forward.1']
    #allocation10 [shape = 'u8[8192]{0}', space=vmem, size = 0x2000, scoped, tag = 'input window, operand 3']
    #allocation11 [shape = 'u8[16384]{0}', space=vmem, size = 0x4000, scoped, tag = 'output window, operand 0, single buffered']
    %9 = vsyncpa [#allocation6], 0
    %s10 = scalar_lea.sflag [#allocation6], 1
    %11 = vsyncpa %s10, 0
    %12 = vsyncpa [#allocation9], 0
    %s13 = scalar_lea.sflag [#allocation9], 1
    %14 = vsyncpa %s13, 0
    %15 = vsyncpa [#allocation7], 0
    loop: start=0, step=1, limit=4
    $region2: #{res_conv1d_block_forward.1} parent=1 // loop_pre_header
      _
    $region3: #{res_conv1d_block_forward.1} parent=1 // loop_header
      %s17 = sphi 0, %s21
      %p18 = scmp.ge.s32.totalorder %s17, 4
      %s27 = sphi 0, %s29
      %s30 = sphi 0, %s27
      %s31 = sphi 0, %s30
      %s47 = sphi 0, %s31
      %s53 = sphi 0, %s55
      %s56 = sphi 0, %s53
      %s57 = sphi 0, %s56
      %s73 = sphi 0, %s57
      %s79 = sphi 0, %s81
      %s82 = sphi 0, %s79
      %s83 = sphi 0, %s82
      %s99 = sphi 0, %s83
      %s103 = sphi 0, %s103
      %s105 = sphi 0, %s103
      %s106 = sphi 0, %s105
      %s120 = sphi 0, %s106
    $region4: #{res_conv1d_block_forward.1} parent=1 // loop_header_branch
      %20 = sbr.rel (%p18) target = $region8
    $region5: #{res_conv1d_block_forward.1} parent=1 // loop_body
      %s22 = ssub.s32 %s17, 1
      %s23 = ssub.s32 %s17, 2
      %s24 = sadd.s32 %s17, 1
      %s25 = ssub.s32 %s17, %s24
      %p26 = scmp.eq.s32.totalorder %s25, 0
      %s28 = sadd.s32 %s27, 1
      %s29 = scalar_select %p26, %s27, %s28
      %p32 = pneg %p26
      %p33 = scmp.eq.s32.totalorder %s17, 1
      %p34 = por %p32, %p33
      %p35 = scmp.ne.s32.totalorder %s27, %s30
      %p36 = scmp.eq.s32.totalorder %s17, 0
      %p37 = por %p35, %p36
      %p38 = scmp.ne.s32.totalorder %s27, %s30
      %p39 = scmp.eq.s32.totalorder %s22, 1
      %p40 = por %p38, %p39
      %p41 = scmp.ne.s32.totalorder %s30, %s31
      %p42 = scmp.eq.s32.totalorder %s22, 0
      %p43 = por %p41, %p42
      %p44 = scmp.ne.s32.totalorder %s30, %s31
      %p45 = scmp.eq.s32.totalorder %s23, 1
      %p46 = por %p44, %p45
      %p48 = scmp.ne.s32.totalorder %s31, %s47
      %p49 = scmp.eq.s32.totalorder %s23, 0
      %p50 = por %p48, %p49
      %s51 = ssub.s32 %s17, %s24
      %p52 = scmp.eq.s32.totalorder %s51, 0
      %s54 = sadd.s32 %s53, 1
      %s55 = scalar_select %p52, %s53, %s54
      %p58 = pneg %p52
      %p59 = scmp.eq.s32.totalorder %s17, 1
      %p60 = por %p58, %p59
      %p61 = scmp.ne.s32.totalorder %s53, %s56
      %p62 = scmp.eq.s32.totalorder %s17, 0
      %p63 = por %p61, %p62
      %p64 = scmp.ne.s32.totalorder %s53, %s56
      %p65 = scmp.eq.s32.totalorder %s22, 1
      %p66 = por %p64, %p65
      %p67 = scmp.ne.s32.totalorder %s56, %s57
      %p68 = scmp.eq.s32.totalorder %s22, 0
      %p69 = por %p67, %p68
      %p70 = scmp.ne.s32.totalorder %s56, %s57
      %p71 = scmp.eq.s32.totalorder %s23, 1
      %p72 = por %p70, %p71
      %p74 = scmp.ne.s32.totalorder %s57, %s73
      %p75 = scmp.eq.s32.totalorder %s23, 0
      %p76 = por %p74, %p75
      %s77 = ssub.s32 %s17, %s24
      %p78 = scmp.eq.s32.totalorder %s77, 0
      %s80 = sadd.s32 %s79, 1
      %s81 = scalar_select %p78, %s79, %s80
      %p84 = pneg %p78
      %p85 = scmp.eq.s32.totalorder %s17, 1
      %p86 = por %p84, %p85
      %p87 = scmp.ne.s32.totalorder %s79, %s82
      %p88 = scmp.eq.s32.totalorder %s17, 0
      %p89 = por %p87, %p88
      %p90 = scmp.ne.s32.totalorder %s79, %s82
      %p91 = scmp.eq.s32.totalorder %s22, 1
      %p92 = por %p90, %p91
      %p93 = scmp.ne.s32.totalorder %s82, %s83
      %p94 = scmp.eq.s32.totalorder %s22, 0
      %p95 = por %p93, %p94
      %p96 = scmp.ne.s32.totalorder %s82, %s83
      %p97 = scmp.eq.s32.totalorder %s23, 1
      %p98 = por %p96, %p97
      %p100 = scmp.ne.s32.totalorder %s83, %s99
      %p101 = scmp.eq.s32.totalorder %s23, 0
      %p102 = por %p100, %p101
      %s104 = sadd.s32 %s103, 1
      %p107 = scmp.eq.s32.totalorder %s17, 1
      %p108 = scmp.ne.s32.totalorder %s103, %s105
      %p109 = scmp.eq.s32.totalorder %s17, 0
      %p110 = por %p108, %p109
      %p111 = scmp.ne.s32.totalorder %s103, %s105
      %p112 = scmp.eq.s32.totalorder %s22, 1
      %p113 = por %p111, %p112
      %p114 = scmp.ne.s32.totalorder %s105, %s106
      %p115 = scmp.eq.s32.totalorder %s22, 0
      %p116 = por %p114, %p115
      %p117 = scmp.ne.s32.totalorder %s105, %s106
      %p118 = scmp.eq.s32.totalorder %s23, 1
      %p119 = por %p117, %p118
      %p121 = scmp.ne.s32.totalorder %s106, %s120
      %p122 = scmp.eq.s32.totalorder %s23, 0
      %p123 = por %p121, %p122
      %p124 = scmp.le.s32.totalorder 1, %s17
      %p125 = scmp.lt.s32.totalorder %s17, 3
      %p126 = pnand %p124, %p125
      %p127 = pneg %p126
      // Predicated region
      $region9: #{res_conv1d_block_forward.1} parent=5 // pred_check
        _
      $region10: #{res_conv1d_block_forward.1} parent=5 // pred_check_branch
        %129 = sbr.rel (%p126) target = $region12
      $region11: #{res_conv1d_block_forward.1} parent=5 // pred_region
        %s130 = ssub.s32 %s17, 1
      $region12: #{res_conv1d_block_forward.1} parent=5 // pred_fallthru
        _
      %p131 = scmp.lt.s32.totalorder %s17, 2
      // Predicated region
      $region13: #{res_conv1d_block_forward.1} parent=5 // pred_check
        %p132 = pneg %p131
      $region14: #{res_conv1d_block_forward.1} parent=5 // pred_check_branch
        %134 = sbr.rel (%p132) target = $region16
      $region15: #{res_conv1d_block_forward.1} parent=5 // pred_region
        // Predicated region
        $region17: #{res_conv1d_block_forward.1} parent=15 // pred_check
          %p135 = pneg %p37
        $region18: #{res_conv1d_block_forward.1} parent=15 // pred_check_branch
          %137 = sbr.rel (%p135) target = $region20
        $region19: #{res_conv1d_block_forward.1} parent=15 // pred_region
          %s138 = sand.u32 %s27, 1
          %s139 = scalar_lea.sflag [#allocation6], %s138
          %s140 = sand.u32 %s27, 1
          %s141 = smul.addr %s140, 192
          %s142 = scalar_lea.vmem [#allocation5], %s141
          %s143 = smul.u32 3, %s17
          %s145 = ssub.s32 3072, 3072
          %146 = vsyncadd %s139, %s145
          %s147 = smul.addr %s143, 16
          %s148 = smul.addr %s147, 64
          %s149 = scalar_lea.hbm %s1, %s148
          %s150 = sshll.u32 %s142, 4
          %s151 = int_to_ptr.vmem [resolvable:$true] %s150
          %156 = dma.hbm_to_vmem [thread:$0]  %s149, 3072, %s151, %s139, 64, 64, 4
        $region20: #{res_conv1d_block_forward.1} parent=15 // pred_fallthru
          _
        // Predicated region
        $region21: #{res_conv1d_block_forward.1} parent=15 // pred_check
          %p157 = pneg %p63
        $region22: #{res_conv1d_block_forward.1} parent=15 // pred_check_branch
          %159 = sbr.rel (%p157) target = $region24
        $region23: #{res_conv1d_block_forward.1} parent=15 // pred_region
          %s160 = sand.u32 %s17, 1
          %s161 = scalar_lea.sflag [#allocation9], %s160
          %s162 = sand.u32 %s53, 1
          %s163 = smul.addr %s162, 192
          %s164 = scalar_lea.vmem [#allocation8], %s163
          %s165 = smul.u32 3, %s17
          %s167 = ssub.s32 3072, 3072
          %168 = vsyncadd %s161, %s167
          %s169 = smul.addr %s165, 16
          %s170 = smul.addr %s169, 64
          %s171 = scalar_lea.hbm %s2, %s170
          %s172 = sshll.u32 %s164, 4
          %s173 = int_to_ptr.vmem [resolvable:$true] %s172
          %178 = dma.hbm_to_vmem [thread:$0]  %s171, 3072, %s173, %s161, 64, 64, 4
        $region24: #{res_conv1d_block_forward.1} parent=15 // pred_fallthru
          _
        // Predicated region
        $region25: #{res_conv1d_block_forward.1} parent=15 // pred_check
          %p179 = pneg %p89
        $region26: #{res_conv1d_block_forward.1} parent=15 // pred_check_branch
          %181 = sbr.rel (%p179) target = $region28
        $region27: #{res_conv1d_block_forward.1} parent=15 // pred_region
          %s182 = sand.u32 %s17, 1
          %s183 = scalar_lea.sflag [#allocation9], %s182
          %s184 = sand.u32 %s79, 1
          %s185 = smul.addr %s184, 8
          %s186 = scalar_lea.vmem [#allocation10], %s185
          %s188 = ssub.s32 128, 128
          %189 = vsyncadd %s183, %s188
          %s190 = smul.addr %s17, 128
          %s191 = scalar_lea.hbm %s3, %s190
          %s193 = sshll.u32 %s186, 4
          %s194 = int_to_ptr.vmem [resolvable:$true] %s193
          %196 = dma.hbm_to_vmem [thread:$0]  %s191, 128, %s194, %s183
        $region28: #{res_conv1d_block_forward.1} parent=15 // pred_fallthru
          _
      $region16: #{res_conv1d_block_forward.1} parent=5 // pred_fallthru
        _
      %p197 = scmp.le.s32.totalorder 1, %s17
      %p198 = scmp.lt.s32.totalorder %s17, 3
      %p199 = pnand %p197, %p198
      %p200 = pneg %p199
      // Predicated region
      $region29: #{res_conv1d_block_forward.1} parent=5 // pred_check
        _
      $region30: #{res_conv1d_block_forward.1} parent=5 // pred_check_branch
        %202 = sbr.rel (%p199) target = $region32
      $region31: #{res_conv1d_block_forward.1} parent=5 // pred_region
        %s203 = ssub.s32 %s17, 1
        %s204 = sand.u32 %s30, 1
        %s205 = scalar_lea.sflag [#allocation6], %s204
        %s206 = sand.u32 %s30, 1
        %s207 = smul.addr %s206, 192
        %s208 = scalar_lea.vmem [#allocation5], %s207
        // Predicated region
        $region33: #{res_conv1d_block_forward.1} parent=31 // pred_check
          %p209 = pneg %p43
        $region34: #{res_conv1d_block_forward.1} parent=31 // pred_check_branch
          %211 = sbr.rel (%p209) target = $region36
        $region35: #{res_conv1d_block_forward.1} parent=31 // pred_region
          %212 = dma.done %s205, 3072
        $region36: #{res_conv1d_block_forward.1} parent=31 // pred_fallthru
          _
        %s213 = sand.u32 %s22, 1
        %s214 = scalar_lea.sflag [#allocation9], %s213
        %s215 = sand.u32 %s56, 1
        %s216 = smul.addr %s215, 192
        %s217 = scalar_lea.vmem [#allocation8], %s216
        // Predicated region
        $region37: #{res_conv1d_block_forward.1} parent=31 // pred_check
          %p218 = pneg %p69
        $region38: #{res_conv1d_block_forward.1} parent=31 // pred_check_branch
          %220 = sbr.rel (%p218) target = $region40
        $region39: #{res_conv1d_block_forward.1} parent=31 // pred_region
          %221 = dma.done %s214, 3072
        $region40: #{res_conv1d_block_forward.1} parent=31 // pred_fallthru
          _
        %s222 = sand.u32 %s22, 1
        %s223 = scalar_lea.sflag [#allocation9], %s222
        %s224 = sand.u32 %s82, 1
        %s225 = smul.addr %s224, 8
        %s226 = scalar_lea.vmem [#allocation10], %s225
        // Predicated region
        $region41: #{res_conv1d_block_forward.1} parent=31 // pred_check
          %p227 = pneg %p95
        $region42: #{res_conv1d_block_forward.1} parent=31 // pred_check_branch
          %229 = sbr.rel (%p227) target = $region44
        $region43: #{res_conv1d_block_forward.1} parent=31 // pred_region
          %230 = dma.done %s223, 128
        $region44: #{res_conv1d_block_forward.1} parent=31 // pred_fallthru
          _
        %s231 = sand.u32 %s30, 1
        %s232 = scalar_lea.sflag [#allocation6], %s231
        %s233 = sand.u32 %s30, 1
        %s234 = smul.addr %s233, 192
        %s235 = scalar_lea.vmem [#allocation5], %s234
        %p236 = pneg %p43
        %p237 = pneg %p40
        %s238 = sand.u32 %s22, 1
        %s239 = scalar_lea.sflag [#allocation9], %s238
        %s240 = sand.u32 %s56, 1
        %s241 = smul.addr %s240, 192
        %s242 = scalar_lea.vmem [#allocation8], %s241
        %p243 = pneg %p69
        %p244 = pneg %p66
        %s245 = sand.u32 %s22, 1
        %s246 = scalar_lea.sflag [#allocation9], %s245
        %s247 = sand.u32 %s82, 1
        %s248 = smul.addr %s247, 8
        %s249 = scalar_lea.vmem [#allocation10], %s248
        %p250 = pneg %p95
        %p251 = pneg %p92
        %p252 = pneg %p116
        %p253 = pneg %p113
        %s254 = smul.u32 3, %s22
        %s255 = smul.u32 3, %s22
        %p257 = scmp.eq.s32.totalorder %s22, 0
        // Predicated region
        $region45: #{res_conv1d_block_forward.1} parent=31 // pred_check
          %p258 = pneg %p257
        $region46: #{res_conv1d_block_forward.1} parent=31 // pred_check_branch
          %260 = sbr.rel (%p258) target = $region48
        $region47: #{res_conv1d_block_forward.1} parent=31 // pred_region
          %261 = vst [vmem:[#allocation3] sm:$0xff] 0.0
          %262 = vst [vmem:[#allocation3 + $0x8] sm:$0xff] 0.0
          %263 = vst [vmem:[#allocation3 + $0x10] sm:$0x3] 0.0
          %264 = vst [vmem:[#allocation3 + $0x18] sm:$0xff] 0.0
          %265 = vst [vmem:[#allocation3 + $0x20] sm:$0xff] 0.0
          %266 = vst [vmem:[#allocation3 + $0x28] sm:$0x3] 0.0
          %s268 = sshll.u32 [#allocation2], 4
          %s269 = int_to_ptr.vmem [resolvable:$true] %s268
          %271 = dma.hbm_to_vmem [thread:$0]  %s0, 576, %s269, [#allocation4], 384, 384, 18
          %s272 = smul.u32 2, 18
          %s273 = smul.u32 %s272, 1
          %s274 = sshll.u32 %s273, 4
          %275 = dma.done [#allocation4], %s274
        $region48: #{res_conv1d_block_forward.1} parent=31 // pred_fallthru
          _
        %v276 = vld [vmem:[#allocation2] sm:$0xff]
        %v277 = vld [vmem:[#allocation2 + $0x8] sm:$0xff]
        %v278 = vld [vmem:[#allocation2 + $0x10] sm:$0x3]
        %v279 = vld [vmem:[#allocation2 + $0x18] sm:$0xff]
        %v280 = vld [vmem:[#allocation2 + $0x20] sm:$0xff]
        %v281 = vld [vmem:[#allocation2 + $0x28] sm:$0x3]
        %v282 = vld [vmem:[%s226] sm:$0xff]
        %v283 = vpack.c.bf16 %v277, %v276
        %v284 = vpack.c.bf16 %v280, %v279
        %v285 = vld [vmem:[%s208] sm:$0xf]
        %v286 = vld [vmem:[%s208 + $0x4] sm:$0xf]
        %v287 = vld [vmem:[%s208 + $0x8] sm:$0xf]
        %v288 = vld [vmem:[%s208 + $0xc] sm:$0xf]
        %v289 = vld [vmem:[%s208 + $0x10] sm:$0xf]
        %v290 = vld [vmem:[%s208 + $0x14] sm:$0xf]
        %v291 = vld [vmem:[%s208 + $0x18] sm:$0xf]
        %v292 = vld [vmem:[%s208 + $0x1c] sm:$0xf]
        %v293 = vld [vmem:[%s208 + $0x20] sm:$0xf]
        %v294 = vld [vmem:[%s208 + $0x24] sm:$0xf]
        %v295 = vld [vmem:[%s208 + $0x28] sm:$0xf]
        %v296 = vld [vmem:[%s208 + $0x2c] sm:$0xf]
        %v297 = vld [vmem:[%s208 + $0x30] sm:$0xf]
        %v298 = vld [vmem:[%s208 + $0x34] sm:$0xf]
        %v299 = vld [vmem:[%s208 + $0x38] sm:$0xf]
        %v300 = vld [vmem:[%s208 + $0x3c] sm:$0xf]
        %vm307 = vcmask 1046528
        %v308 = vrot.slane %v276, 1
        %v309 = vrot.slane %v277, 1
        %v310 = vsel %vm307, %v308, %v309
        %v311 = vrot.slane %v278, 1
        %v312 = vsel %vm307, %v309, %v311
        %v313 = vrot.slane %v279, 1
        %v314 = vrot.slane %v280, 1
        %v315 = vsel %vm307, %v313, %v314
        %v316 = vrot.slane %v281, 1
        %v317 = vsel %vm307, %v314, %v316
        %v322 = vpack.c.bf16 %v312, %v310
        %v323 = vpack.c.bf16 %v317, %v315
        %s324 = scalar_lea.vmem %s208, 64 [#allocation5]
        %v325 = vld [vmem:[%s324] sm:$0xf]
        %v326 = vld [vmem:[%s324 + $0x4] sm:$0xf]
        %v327 = vld [vmem:[%s324 + $0x8] sm:$0xf]
        %v328 = vld [vmem:[%s324 + $0xc] sm:$0xf]
        %v329 = vld [vmem:[%s324 + $0x10] sm:$0xf]
        %v330 = vld [vmem:[%s324 + $0x14] sm:$0xf]
        %v331 = vld [vmem:[%s324 + $0x18] sm:$0xf]
        %v332 = vld [vmem:[%s324 + $0x1c] sm:$0xf]
        %v333 = vld [vmem:[%s324 + $0x20] sm:$0xf]
        %v334 = vld [vmem:[%s324 + $0x24] sm:$0xf]
        %v335 = vld [vmem:[%s324 + $0x28] sm:$0xf]
        %v336 = vld [vmem:[%s324 + $0x2c] sm:$0xf]
        %v337 = vld [vmem:[%s324 + $0x30] sm:$0xf]
        %v338 = vld [vmem:[%s324 + $0x34] sm:$0xf]
        %v339 = vld [vmem:[%s324 + $0x38] sm:$0xf]
        %v340 = vld [vmem:[%s324 + $0x3c] sm:$0xf]
        %v357 = vunpack.c.l.b16 %v325
        %v358 = vunpack.c.l.b16 %v326
        %v359 = vunpack.c.l.b16 %v327
        %v360 = vunpack.c.l.b16 %v328
        %v361 = vunpack.c.l.b16 %v329
        %v362 = vunpack.c.l.b16 %v330
        %v363 = vunpack.c.l.b16 %v331
        %v364 = vunpack.c.l.b16 %v332
        %v365 = vunpack.c.l.b16 %v333
        %v366 = vunpack.c.l.b16 %v334
        %v367 = vunpack.c.l.b16 %v335
        %v368 = vunpack.c.l.b16 %v336
        %v369 = vunpack.c.l.b16 %v337
        %v370 = vunpack.c.l.b16 %v338
        %v371 = vunpack.c.l.b16 %v339
        %v372 = vunpack.c.l.b16 %v340
        %v373 = vpack.c.b16 %v358, %v357
        %v374 = vpack.c.b16 %v360, %v359
        %v375 = vpack.c.b16 %v362, %v361
        %v376 = vpack.c.b16 %v364, %v363
        %v377 = vpack.c.b16 %v366, %v365
        %v378 = vpack.c.b16 %v368, %v367
        %v379 = vpack.c.b16 %v370, %v369
        %v380 = vpack.c.b16 %v372, %v371
        %389 = vmatprep.subr.bf16.mxu0 0
        %390 = vmatpush1.bf16.msra.mxu0 %v373
        %391 = vmatprep.subr.bf16.mxu0 0
        %392 = vmatpush1.bf16.msra.mxu0 %v374
        %393 = vmatprep.subr.bf16.mxu0 0
        %394 = vmatpush1.bf16.msra.mxu0 %v375
        %395 = vmatprep.subr.bf16.mxu0 0
        %396 = vmatpush1.bf16.msra.mxu0 %v376
        %397 = vmatprep.subr.bf16.mxu0 0
        %398 = vmatpush1.bf16.msra.mxu0 %v377
        %399 = vmatprep.subr.bf16.mxu0 0
        %400 = vmatpush1.bf16.msra.mxu0 %v378
        %401 = vmatprep.subr.bf16.mxu0 0
        %402 = vmatpush1.bf16.msra.mxu0 %v379
        %403 = vmatprep.subr.bf16.mxu0 0
        %404 = vmatpush1.bf16.msra.mxu0 %v380
        %405 = vmatprep.subr.bf16.mxu0 0
        %406 = vmatpush1.bf16.msra.mxu0 0
        %407 = vmatprep.subr.bf16.mxu0 0
        %408 = vmatpush1.bf16.msra.mxu0 0
        %409 = vmatprep.subr.bf16.mxu0 0
        %410 = vmatpush1.bf16.msra.mxu0 0
        %411 = vmatprep.subr.bf16.mxu0 0
        %412 = vmatpush1.bf16.msra.mxu0 0
        %413 = vmatprep.subr.bf16.mxu0 0
        %414 = vmatpush1.bf16.msra.mxu0 0
        %415 = vmatprep.subr.bf16.mxu0 0
        %416 = vmatpush1.bf16.msra.mxu0 0
        %417 = vmatprep.subr.bf16.mxu0 0
        %418 = vmatpush1.bf16.msra.mxu0 0
        %419 = vmatprep.subr.bf16.mxu0 0
        %420 = vmatpush1.bf16.msra.mxu0 0
        %421 = vmatprep.mubr.bf16.mxu0 0
        %422 = vmatmul.mubr.bf16.gmra.mrb[0].mxu0 %v322
        %v423 = vpop.f32.mrb[0].mxu0
        %v424 = vadd.f32 0.0, %v423
        %v425 = vpop.f32.mrb[0].mxu0
        %v426 = vpop.f32.mrb[0].mxu0
        %v427 = vadd.f32 0.0, %v426
        %v428 = vpop.f32.mrb[0].mxu0
        %429 = vmatprep.mubr.bf16.mxu0 0
        %430 = vmatmul.mubr.bf16.gmra.mrb[0].mxu0 %v323
        %v431 = vpop.f32.mrb[0].mxu0
        %v432 = vadd.f32 0.0, %v431
        %v433 = vpop.f32.mrb[0].mxu0
        %v434 = vpop.f32.mrb[0].mxu0
        %v435 = vadd.f32 0.0, %v434
        %v436 = vpop.f32.mrb[0].mxu0
        %437 = vdwg.mxu0
        %v454 = vunpack.c.l.b16 %v285
        %v455 = vunpack.c.l.b16 %v286
        %v456 = vunpack.c.l.b16 %v287
        %v457 = vunpack.c.l.b16 %v288
        %v458 = vunpack.c.l.b16 %v289
        %v459 = vunpack.c.l.b16 %v290
        %v460 = vunpack.c.l.b16 %v291
        %v461 = vunpack.c.l.b16 %v292
        %v462 = vunpack.c.l.b16 %v293
        %v463 = vunpack.c.l.b16 %v294
        %v464 = vunpack.c.l.b16 %v295
        %v465 = vunpack.c.l.b16 %v296
        %v466 = vunpack.c.l.b16 %v297
        %v467 = vunpack.c.l.b16 %v298
        %v468 = vunpack.c.l.b16 %v299
        %v469 = vunpack.c.l.b16 %v300
        %v470 = vpack.c.b16 %v455, %v454
        %v471 = vpack.c.b16 %v457, %v456
        %v472 = vpack.c.b16 %v459, %v458
        %v473 = vpack.c.b16 %v461, %v460
        %v474 = vpack.c.b16 %v463, %v462
        %v475 = vpack.c.b16 %v465, %v464
        %v476 = vpack.c.b16 %v467, %v466
        %v477 = vpack.c.b16 %v469, %v468
        %486 = vmatprep.subr.bf16.mxu0 0
        %487 = vmatpush1.bf16.msra.mxu0 %v470
        %488 = vmatprep.subr.bf16.mxu0 0
        %489 = vmatpush1.bf16.msra.mxu0 %v471
        %490 = vmatprep.subr.bf16.mxu0 0
        %491 = vmatpush1.bf16.msra.mxu0 %v472
        %492 = vmatprep.subr.bf16.mxu0 0
        %493 = vmatpush1.bf16.msra.mxu0 %v473
        %494 = vmatprep.subr.bf16.mxu0 0
        %495 = vmatpush1.bf16.msra.mxu0 %v474
        %496 = vmatprep.subr.bf16.mxu0 0
        %497 = vmatpush1.bf16.msra.mxu0 %v475
        %498 = vmatprep.subr.bf16.mxu0 0
        %499 = vmatpush1.bf16.msra.mxu0 %v476
        %500 = vmatprep.subr.bf16.mxu0 0
        %501 = vmatpush1.bf16.msra.mxu0 %v477
        %502 = vmatprep.subr.bf16.mxu0 0
        %503 = vmatpush1.bf16.msra.mxu0 0
        %504 = vmatprep.subr.bf16.mxu0 0
        %505 = vmatpush1.bf16.msra.mxu0 0
        %506 = vmatprep.subr.bf16.mxu0 0
        %507 = vmatpush1.bf16.msra.mxu0 0
        %508 = vmatprep.subr.bf16.mxu0 0
        %509 = vmatpush1.bf16.msra.mxu0 0
        %510 = vmatprep.subr.bf16.mxu0 0
        %511 = vmatpush1.bf16.msra.mxu0 0
        %512 = vmatprep.subr.bf16.mxu0 0
        %513 = vmatpush1.bf16.msra.mxu0 0
        %514 = vmatprep.subr.bf16.mxu0 0
        %515 = vmatpush1.bf16.msra.mxu0 0
        %516 = vmatprep.subr.bf16.mxu0 0
        %517 = vmatpush1.bf16.msra.mxu0 0
        %518 = vmatprep.mubr.bf16.mxu0 0
        %519 = vmatmul.mubr.bf16.gmra.mrb[0].mxu0 %v283
        %v520 = vpop.f32.mrb[0].mxu0
        %v521 = vadd.f32 %v424, %v520
        %v522 = vpop.f32.mrb[0].mxu0
        %v523 = vpop.f32.mrb[0].mxu0
        %v524 = vadd.f32 %v427, %v523
        %v525 = vpop.f32.mrb[0].mxu0
        %526 = vmatprep.mubr.bf16.mxu0 0
        %527 = vmatmul.mubr.bf16.gmra.mrb[0].mxu0 %v284
        %v528 = vpop.f32.mrb[0].mxu0
        %v529 = vadd.f32 %v432, %v528
        %v530 = vpop.f32.mrb[0].mxu0
        %v531 = vpop.f32.mrb[0].mxu0
        %v532 = vadd.f32 %v435, %v531
        %v533 = vpop.f32.mrb[0].mxu0
        %534 = vdwg.mxu0
        %vm535 = vcmask 1045504
        %v536 = vrot.slane %v276, 2
        %v537 = vrot.slane %v277, 2
        %v538 = vsel %vm535, %v536, %v537
        %v539 = vrot.slane %v278, 2
        %v540 = vsel %vm535, %v537, %v539
        %v541 = vrot.slane %v279, 2
        %v542 = vrot.slane %v280, 2
        %v543 = vsel %vm535, %v541, %v542
        %v544 = vrot.slane %v281, 2
        %v545 = vsel %vm535, %v542, %v544
        %v550 = vpack.c.bf16 %v540, %v538
        %v551 = vpack.c.bf16 %v545, %v543
        %s552 = scalar_lea.vmem %s208, 128 [#allocation5]
        %v553 = vld [vmem:[%s552] sm:$0xf]
        %v554 = vld [vmem:[%s552 + $0x4] sm:$0xf]
        %v555 = vld [vmem:[%s552 + $0x8] sm:$0xf]
        %v556 = vld [vmem:[%s552 + $0xc] sm:$0xf]
        %v557 = vld [vmem:[%s552 + $0x10] sm:$0xf]
        %v558 = vld [vmem:[%s552 + $0x14] sm:$0xf]
        %v559 = vld [vmem:[%s552 + $0x18] sm:$0xf]
        %v560 = vld [vmem:[%s552 + $0x1c] sm:$0xf]
        %v561 = vld [vmem:[%s552 + $0x20] sm:$0xf]
        %v562 = vld [vmem:[%s552 + $0x24] sm:$0xf]
        %v563 = vld [vmem:[%s552 + $0x28] sm:$0xf]
        %v564 = vld [vmem:[%s552 + $0x2c] sm:$0xf]
        %v565 = vld [vmem:[%s552 + $0x30] sm:$0xf]
        %v566 = vld [vmem:[%s552 + $0x34] sm:$0xf]
        %v567 = vld [vmem:[%s552 + $0x38] sm:$0xf]
        %v568 = vld [vmem:[%s552 + $0x3c] sm:$0xf]
        %v585 = vunpack.c.l.b16 %v553
        %v586 = vunpack.c.l.b16 %v554
        %v587 = vunpack.c.l.b16 %v555
        %v588 = vunpack.c.l.b16 %v556
        %v589 = vunpack.c.l.b16 %v557
        %v590 = vunpack.c.l.b16 %v558
        %v591 = vunpack.c.l.b16 %v559
        %v592 = vunpack.c.l.b16 %v560
        %v593 = vunpack.c.l.b16 %v561
        %v594 = vunpack.c.l.b16 %v562
        %v595 = vunpack.c.l.b16 %v563
        %v596 = vunpack.c.l.b16 %v564
        %v597 = vunpack.c.l.b16 %v565
        %v598 = vunpack.c.l.b16 %v566
        %v599 = vunpack.c.l.b16 %v567
        %v600 = vunpack.c.l.b16 %v568
        %v601 = vpack.c.b16 %v586, %v585
        %v602 = vpack.c.b16 %v588, %v587
        %v603 = vpack.c.b16 %v590, %v589
        %v604 = vpack.c.b16 %v592, %v591
        %v605 = vpack.c.b16 %v594, %v593
        %v606 = vpack.c.b16 %v596, %v595
        %v607 = vpack.c.b16 %v598, %v597
        %v608 = vpack.c.b16 %v600, %v599
        %617 = vmatprep.subr.bf16.mxu0 0
        %618 = vmatpush1.bf16.msra.mxu0 %v601
        %619 = vmatprep.subr.bf16.mxu0 0
        %620 = vmatpush1.bf16.msra.mxu0 %v602
        %621 = vmatprep.subr.bf16.mxu0 0
        %622 = vmatpush1.bf16.msra.mxu0 %v603
        %623 = vmatprep.subr.bf16.mxu0 0
        %624 = vmatpush1.bf16.msra.mxu0 %v604
        %625 = vmatprep.subr.bf16.mxu0 0
        %626 = vmatpush1.bf16.msra.mxu0 %v605
        %627 = vmatprep.subr.bf16.mxu0 0
        %628 = vmatpush1.bf16.msra.mxu0 %v606
        %629 = vmatprep.subr.bf16.mxu0 0
        %630 = vmatpush1.bf16.msra.mxu0 %v607
        %631 = vmatprep.subr.bf16.mxu0 0
        %632 = vmatpush1.bf16.msra.mxu0 %v608
        %633 = vmatprep.subr.bf16.mxu0 0
        %634 = vmatpush1.bf16.msra.mxu0 0
        %635 = vmatprep.subr.bf16.mxu0 0
        %636 = vmatpush1.bf16.msra.mxu0 0
        %637 = vmatprep.subr.bf16.mxu0 0
        %638 = vmatpush1.bf16.msra.mxu0 0
        %639 = vmatprep.subr.bf16.mxu0 0
        %640 = vmatpush1.bf16.msra.mxu0 0
        %641 = vmatprep.subr.bf16.mxu0 0
        %642 = vmatpush1.bf16.msra.mxu0 0
        %643 = vmatprep.subr.bf16.mxu0 0
        %644 = vmatpush1.bf16.msra.mxu0 0
        %645 = vmatprep.subr.bf16.mxu0 0
        %646 = vmatpush1.bf16.msra.mxu0 0
        %647 = vmatprep.subr.bf16.mxu0 0
        %648 = vmatpush1.bf16.msra.mxu0 0
        %649 = vmatprep.mubr.bf16.mxu0 0
        %650 = vmatmul.mubr.bf16.gmra.mrb[0].mxu0 %v550
        %v651 = vpop.f32.mrb[0].mxu0
        %v652 = vadd.f32 0.0, %v651
        %v653 = vpop.f32.mrb[0].mxu0
        %v654 = vpop.f32.mrb[0].mxu0
        %v655 = vadd.f32 0.0, %v654
        %v656 = vpop.f32.mrb[0].mxu0
        %657 = vmatprep.mubr.bf16.mxu0 0
        %658 = vmatmul.mubr.bf16.gmra.mrb[0].mxu0 %v551
        %v659 = vpop.f32.mrb[0].mxu0
        %v660 = vadd.f32 0.0, %v659
        %v661 = vpop.f32.mrb[0].mxu0
        %v662 = vpop.f32.mrb[0].mxu0
        %v663 = vadd.f32 0.0, %v662
        %v664 = vpop.f32.mrb[0].mxu0
        %665 = vdwg.mxu0
        %v666 = vadd.f32 %v521, %v652
        %v667 = vadd.f32 %v524, %v655
        %v668 = vadd.f32 %v529, %v660
        %v669 = vadd.f32 %v532, %v663
        %v670 = vadd.f32 %v666, %v667
        %v671 = vadd.f32 %v670, %v668
        %v672 = vadd.f32 %v671, %v669
        %v673 = vrot.slane %v672, 4
        %v674 = vadd.f32 %v672, %v673
        %v675 = vrot.slane %v674, 2
        %v676 = vadd.f32 %v674, %v675
        %v677 = vrot.slane %v676, 1
        %v678 = vadd.f32 %v676, %v677
        %v679 = vrcp.pop 32.0
        %v680 = vmul.f32 %v678, %v679
        %v681 = vsub.f32 %v666, %v680
        %v682 = vsub.f32 %v667, %v680
        %v683 = vsub.f32 %v668, %v680
        %v684 = vsub.f32 %v669, %v680
        %v685 = vmul.f32 %v681, %v681
        %v686 = vmul.f32 %v682, %v682
        %v687 = vmul.f32 %v683, %v683
        %v688 = vmul.f32 %v684, %v684
        %v689 = vadd.f32 %v685, %v686
        %v690 = vadd.f32 %v689, %v687
        %v691 = vadd.f32 %v690, %v688
        %v692 = vrot.slane %v691, 4
        %v693 = vadd.f32 %v691, %v692
        %v694 = vrot.slane %v693, 2
        %v695 = vadd.f32 %v693, %v694
        %v696 = vrot.slane %v695, 1
        %v697 = vadd.f32 %v695, %v696
        %v698 = vmul.f32 %v697, %v679
        %v699 = vadd.f32 %v698, 1e-05
        %v700 = vrsqrt.pop %v699
        %v701 = vmul.f32 %v282, %v700
        %v702 = vlaneseq
        %v703 = vshrl.u32 %v702, 7
        %v704 = vsub.s32 0, %v703
        %v705 = vrot.slane %v701, %v704
        %v706 = vmul.f32 %v681, %v705
        %v707 = vmul.f32 %v682, %v705
        %v708 = vmul.f32 %v683, %v705
        %v709 = vmul.f32 %v684, %v705
        %v710 = vlaneseq
        %v711 = vshrl.u32 %v710, 7
        %v712 = vsub.s32 1, %v711
        %v713 = vrot.slane %v282, %v712
        %v714 = vadd.f32 %v706, %v713
        %v715 = vadd.f32 %v707, %v713
        %v716 = vadd.f32 %v708, %v713
        %v717 = vadd.f32 %v709, %v713
        %v718 = vmax.f32 %v714, 0.0
        %v719 = vmax.f32 %v715, 0.0
        %v720 = vmax.f32 %v716, 0.0
        %v721 = vmax.f32 %v717, 0.0
        %722 = vst [vmem:[#allocation3 + $0x1] sm:$0xff] %v718
        %723 = vst [vmem:[#allocation3 + $0x9] sm:$0xff] %v719
        %724 = vst [vmem:[#allocation3 + $0x19] sm:$0xff] %v720
        %725 = vst [vmem:[#allocation3 + $0x21] sm:$0xff] %v721
        %v726 = vld [vmem:[#allocation3] sm:$0xff]
        %v727 = vld [vmem:[#allocation3 + $0x8] sm:$0xff]
        %v728 = vld [vmem:[#allocation3 + $0x10] sm:$0x3]
        %v729 = vld [vmem:[#allocation3 + $0x18] sm:$0xff]
        %v730 = vld [vmem:[#allocation3 + $0x20] sm:$0xff]
        %v731 = vld [vmem:[#allocation3 + $0x28] sm:$0x3]
        %v732 = vpack.c.bf16 %v727, %v726
        %v733 = vpack.c.bf16 %v730, %v729
        %v734 = vld [vmem:[%s217] sm:$0xf]
        %v735 = vld [vmem:[%s217 + $0x4] sm:$0xf]
        %v736 = vld [vmem:[%s217 + $0x8] sm:$0xf]
        %v737 = vld [vmem:[%s217 + $0xc] sm:$0xf]
        %v738 = vld [vmem:[%s217 + $0x10] sm:$0xf]
        %v739 = vld [vmem:[%s217 + $0x14] sm:$0xf]
        %v740 = vld [vmem:[%s217 + $0x18] sm:$0xf]
        %v741 = vld [vmem:[%s217 + $0x1c] sm:$0xf]
        %v742 = vld [vmem:[%s217 + $0x20] sm:$0xf]
        %v743 = vld [vmem:[%s217 + $0x24] sm:$0xf]
        %v744 = vld [vmem:[%s217 + $0x28] sm:$0xf]
        %v745 = vld [vmem:[%s217 + $0x2c] sm:$0xf]
        %v746 = vld [vmem:[%s217 + $0x30] sm:$0xf]
        %v747 = vld [vmem:[%s217 + $0x34] sm:$0xf]
        %v748 = vld [vmem:[%s217 + $0x38] sm:$0xf]
        %v749 = vld [vmem:[%s217 + $0x3c] sm:$0xf]
        %v756 = vrot.slane %v726, 1
        %v757 = vrot.slane %v727, 1
        %v758 = vsel %vm307, %v756, %v757
        %v759 = vrot.slane %v728, 1
        %v760 = vsel %vm307, %v757, %v759
        %v761 = vrot.slane %v729, 1
        %v762 = vrot.slane %v730, 1
        %v763 = vsel %vm307, %v761, %v762
        %v764 = vrot.slane %v731, 1
        %v765 = vsel %vm307, %v762, %v764
        %v770 = vpack.c.bf16 %v760, %v758
        %v771 = vpack.c.bf16 %v765, %v763
        %s772 = scalar_lea.vmem %s217, 64 [#allocation8]
        %v773 = vld [vmem:[%s772] sm:$0xf]
        %v774 = vld [vmem:[%s772 + $0x4] sm:$0xf]
        %v775 = vld [vmem:[%s772 + $0x8] sm:$0xf]
        %v776 = vld [vmem:[%s772 + $0xc] sm:$0xf]
        %v777 = vld [vmem:[%s772 + $0x10] sm:$0xf]
        %v778 = vld [vmem:[%s772 + $0x14] sm:$0xf]
        %v779 = vld [vmem:[%s772 + $0x18] sm:$0xf]
        %v780 = vld [vmem:[%s772 + $0x1c] sm:$0xf]
        %v781 = vld [vmem:[%s772 + $0x20] sm:$0xf]
        %v782 = vld [vmem:[%s772 + $0x24] sm:$0xf]
        %v783 = vld [vmem:[%s772 + $0x28] sm:$0xf]
        %v784 = vld [vmem:[%s772 + $0x2c] sm:$0xf]
        %v785 = vld [vmem:[%s772 + $0x30] sm:$0xf]
        %v786 = vld [vmem:[%s772 + $0x34] sm:$0xf]
        %v787 = vld [vmem:[%s772 + $0x38] sm:$0xf]
        %v788 = vld [vmem:[%s772 + $0x3c] sm:$0xf]
        %v805 = vunpack.c.l.b16 %v773
        %v806 = vunpack.c.l.b16 %v774
        %v807 = vunpack.c.l.b16 %v775
        %v808 = vunpack.c.l.b16 %v776
        %v809 = vunpack.c.l.b16 %v777
        %v810 = vunpack.c.l.b16 %v778
        %v811 = vunpack.c.l.b16 %v779
        %v812 = vunpack.c.l.b16 %v780
        %v813 = vunpack.c.l.b16 %v781
        %v814 = vunpack.c.l.b16 %v782
        %v815 = vunpack.c.l.b16 %v783
        %v816 = vunpack.c.l.b16 %v784
        %v817 = vunpack.c.l.b16 %v785
        %v818 = vunpack.c.l.b16 %v786
        %v819 = vunpack.c.l.b16 %v787
        %v820 = vunpack.c.l.b16 %v788
        %v821 = vpack.c.b16 %v806, %v805
        %v822 = vpack.c.b16 %v808, %v807
        %v823 = vpack.c.b16 %v810, %v809
        %v824 = vpack.c.b16 %v812, %v811
        %v825 = vpack.c.b16 %v814, %v813
        %v826 = vpack.c.b16 %v816, %v815
        %v827 = vpack.c.b16 %v818, %v817
        %v828 = vpack.c.b16 %v820, %v819
        %837 = vmatprep.subr.bf16.mxu0 0
        %838 = vmatpush1.bf16.msra.mxu0 %v821
        %839 = vmatprep.subr.bf16.mxu0 0
        %840 = vmatpush1.bf16.msra.mxu0 %v822
        %841 = vmatprep.subr.bf16.mxu0 0
        %842 = vmatpush1.bf16.msra.mxu0 %v823
        %843 = vmatprep.subr.bf16.mxu0 0
        %844 = vmatpush1.bf16.msra.mxu0 %v824
        %845 = vmatprep.subr.bf16.mxu0 0
        %846 = vmatpush1.bf16.msra.mxu0 %v825
        %847 = vmatprep.subr.bf16.mxu0 0
        %848 = vmatpush1.bf16.msra.mxu0 %v826
        %849 = vmatprep.subr.bf16.mxu0 0
        %850 = vmatpush1.bf16.msra.mxu0 %v827
        %851 = vmatprep.subr.bf16.mxu0 0
        %852 = vmatpush1.bf16.msra.mxu0 %v828
        %853 = vmatprep.subr.bf16.mxu0 0
        %854 = vmatpush1.bf16.msra.mxu0 0
        %855 = vmatprep.subr.bf16.mxu0 0
        %856 = vmatpush1.bf16.msra.mxu0 0
        %857 = vmatprep.subr.bf16.mxu0 0
        %858 = vmatpush1.bf16.msra.mxu0 0
        %859 = vmatprep.subr.bf16.mxu0 0
        %860 = vmatpush1.bf16.msra.mxu0 0
        %861 = vmatprep.subr.bf16.mxu0 0
        %862 = vmatpush1.bf16.msra.mxu0 0
        %863 = vmatprep.subr.bf16.mxu0 0
        %864 = vmatpush1.bf16.msra.mxu0 0
        %865 = vmatprep.subr.bf16.mxu0 0
        %866 = vmatpush1.bf16.msra.mxu0 0
        %867 = vmatprep.subr.bf16.mxu0 0
        %868 = vmatpush1.bf16.msra.mxu0 0
        %869 = vmatprep.mubr.bf16.mxu0 0
        %870 = vmatmul.mubr.bf16.gmra.mrb[0].mxu0 %v770
        %v871 = vpop.f32.mrb[0].mxu0
        %v872 = vadd.f32 0.0, %v871
        %v873 = vpop.f32.mrb[0].mxu0
        %v874 = vpop.f32.mrb[0].mxu0
        %v875 = vadd.f32 0.0, %v874
        %v876 = vpop.f32.mrb[0].mxu0
        %877 = vmatprep.mubr.bf16.mxu0 0
        %878 = vmatmul.mubr.bf16.gmra.mrb[0].mxu0 %v771
        %v879 = vpop.f32.mrb[0].mxu0
        %v880 = vadd.f32 0.0, %v879
        %v881 = vpop.f32.mrb[0].mxu0
        %v882 = vpop.f32.mrb[0].mxu0
        %v883 = vadd.f32 0.0, %v882
        %v884 = vpop.f32.mrb[0].mxu0
        %885 = vdwg.mxu0
        %v902 = vunpack.c.l.b16 %v734
        %v903 = vunpack.c.l.b16 %v735
        %v904 = vunpack.c.l.b16 %v736
        %v905 = vunpack.c.l.b16 %v737
        %v906 = vunpack.c.l.b16 %v738
        %v907 = vunpack.c.l.b16 %v739
        %v908 = vunpack.c.l.b16 %v740
        %v909 = vunpack.c.l.b16 %v741
        %v910 = vunpack.c.l.b16 %v742
        %v911 = vunpack.c.l.b16 %v743
        %v912 = vunpack.c.l.b16 %v744
        %v913 = vunpack.c.l.b16 %v745
        %v914 = vunpack.c.l.b16 %v746
        %v915 = vunpack.c.l.b16 %v747
        %v916 = vunpack.c.l.b16 %v748
        %v917 = vunpack.c.l.b16 %v749
        %v918 = vpack.c.b16 %v903, %v902
        %v919 = vpack.c.b16 %v905, %v904
        %v920 = vpack.c.b16 %v907, %v906
        %v921 = vpack.c.b16 %v909, %v908
        %v922 = vpack.c.b16 %v911, %v910
        %v923 = vpack.c.b16 %v913, %v912
        %v924 = vpack.c.b16 %v915, %v914
        %v925 = vpack.c.b16 %v917, %v916
        %934 = vmatprep.subr.bf16.mxu0 0
        %935 = vmatpush1.bf16.msra.mxu0 %v918
        %936 = vmatprep.subr.bf16.mxu0 0
        %937 = vmatpush1.bf16.msra.mxu0 %v919
        %938 = vmatprep.subr.bf16.mxu0 0
        %939 = vmatpush1.bf16.msra.mxu0 %v920
        %940 = vmatprep.subr.bf16.mxu0 0
        %941 = vmatpush1.bf16.msra.mxu0 %v921
        %942 = vmatprep.subr.bf16.mxu0 0
        %943 = vmatpush1.bf16.msra.mxu0 %v922
        %944 = vmatprep.subr.bf16.mxu0 0
        %945 = vmatpush1.bf16.msra.mxu0 %v923
        %946 = vmatprep.subr.bf16.mxu0 0
        %947 = vmatpush1.bf16.msra.mxu0 %v924
        %948 = vmatprep.subr.bf16.mxu0 0
        %949 = vmatpush1.bf16.msra.mxu0 %v925
        %950 = vmatprep.subr.bf16.mxu0 0
        %951 = vmatpush1.bf16.msra.mxu0 0
        %952 = vmatprep.subr.bf16.mxu0 0
        %953 = vmatpush1.bf16.msra.mxu0 0
        %954 = vmatprep.subr.bf16.mxu0 0
        %955 = vmatpush1.bf16.msra.mxu0 0
        %956 = vmatprep.subr.bf16.mxu0 0
        %957 = vmatpush1.bf16.msra.mxu0 0
        %958 = vmatprep.subr.bf16.mxu0 0
        %959 = vmatpush1.bf16.msra.mxu0 0
        %960 = vmatprep.subr.bf16.mxu0 0
        %961 = vmatpush1.bf16.msra.mxu0 0
        %962 = vmatprep.subr.bf16.mxu0 0
        %963 = vmatpush1.bf16.msra.mxu0 0
        %964 = vmatprep.subr.bf16.mxu0 0
        %965 = vmatpush1.bf16.msra.mxu0 0
        %966 = vmatprep.mubr.bf16.mxu0 0
        %967 = vmatmul.mubr.bf16.gmra.mrb[0].mxu0 %v732
        %v968 = vpop.f32.mrb[0].mxu0
        %v969 = vadd.f32 %v872, %v968
        %v970 = vpop.f32.mrb[0].mxu0
        %v971 = vpop.f32.mrb[0].mxu0
        %v972 = vadd.f32 %v875, %v971
        %v973 = vpop.f32.mrb[0].mxu0
        %974 = vmatprep.mubr.bf16.mxu0 0
        %975 = vmatmul.mubr.bf16.gmra.mrb[0].mxu0 %v733
        %v976 = vpop.f32.mrb[0].mxu0
        %v977 = vadd.f32 %v880, %v976
        %v978 = vpop.f32.mrb[0].mxu0
        %v979 = vpop.f32.mrb[0].mxu0
        %v980 = vadd.f32 %v883, %v979
        %v981 = vpop.f32.mrb[0].mxu0
        %982 = vdwg.mxu0
        %v983 = vrot.slane %v726, 2
        %v984 = vrot.slane %v727, 2
        %v985 = vsel %vm535, %v983, %v984
        %v986 = vrot.slane %v728, 2
        %v987 = vsel %vm535, %v984, %v986
        %v988 = vrot.slane %v729, 2
        %v989 = vrot.slane %v730, 2
        %v990 = vsel %vm535, %v988, %v989
        %v991 = vrot.slane %v731, 2
        %v992 = vsel %vm535, %v989, %v991
        %v997 = vpack.c.bf16 %v987, %v985
        %v998 = vpack.c.bf16 %v992, %v990
        %s999 = scalar_lea.vmem %s217, 128 [#allocation8]
        %v1000 = vld [vmem:[%s999] sm:$0xf]
        %v1001 = vld [vmem:[%s999 + $0x4] sm:$0xf]
        %v1002 = vld [vmem:[%s999 + $0x8] sm:$0xf]
        %v1003 = vld [vmem:[%s999 + $0xc] sm:$0xf]
        %v1004 = vld [vmem:[%s999 + $0x10] sm:$0xf]
        %v1005 = vld [vmem:[%s999 + $0x14] sm:$0xf]
        %v1006 = vld [vmem:[%s999 + $0x18] sm:$0xf]
        %v1007 = vld [vmem:[%s999 + $0x1c] sm:$0xf]
        %v1008 = vld [vmem:[%s999 + $0x20] sm:$0xf]
        %v1009 = vld [vmem:[%s999 + $0x24] sm:$0xf]
        %v1010 = vld [vmem:[%s999 + $0x28] sm:$0xf]
        %v1011 = vld [vmem:[%s999 + $0x2c] sm:$0xf]
        %v1012 = vld [vmem:[%s999 + $0x30] sm:$0xf]
        %v1013 = vld [vmem:[%s999 + $0x34] sm:$0xf]
        %v1014 = vld [vmem:[%s999 + $0x38] sm:$0xf]
        %v1015 = vld [vmem:[%s999 + $0x3c] sm:$0xf]
        %v1032 = vunpack.c.l.b16 %v1000
        %v1033 = vunpack.c.l.b16 %v1001
        %v1034 = vunpack.c.l.b16 %v1002
        %v1035 = vunpack.c.l.b16 %v1003
        %v1036 = vunpack.c.l.b16 %v1004
        %v1037 = vunpack.c.l.b16 %v1005
        %v1038 = vunpack.c.l.b16 %v1006
        %v1039 = vunpack.c.l.b16 %v1007
        %v1040 = vunpack.c.l.b16 %v1008
        %v1041 = vunpack.c.l.b16 %v1009
        %v1042 = vunpack.c.l.b16 %v1010
        %v1043 = vunpack.c.l.b16 %v1011
        %v1044 = vunpack.c.l.b16 %v1012
        %v1045 = vunpack.c.l.b16 %v1013
        %v1046 = vunpack.c.l.b16 %v1014
        %v1047 = vunpack.c.l.b16 %v1015
        %v1048 = vpack.c.b16 %v1033, %v1032
        %v1049 = vpack.c.b16 %v1035, %v1034
        %v1050 = vpack.c.b16 %v1037, %v1036
        %v1051 = vpack.c.b16 %v1039, %v1038
        %v1052 = vpack.c.b16 %v1041, %v1040
        %v1053 = vpack.c.b16 %v1043, %v1042
        %v1054 = vpack.c.b16 %v1045, %v1044
        %v1055 = vpack.c.b16 %v1047, %v1046
        %1064 = vmatprep.subr.bf16.mxu0 0
        %1065 = vmatpush1.bf16.msra.mxu0 %v1048
        %1066 = vmatprep.subr.bf16.mxu0 0
        %1067 = vmatpush1.bf16.msra.mxu0 %v1049
        %1068 = vmatprep.subr.bf16.mxu0 0
        %1069 = vmatpush1.bf16.msra.mxu0 %v1050
        %1070 = vmatprep.subr.bf16.mxu0 0
        %1071 = vmatpush1.bf16.msra.mxu0 %v1051
        %1072 = vmatprep.subr.bf16.mxu0 0
        %1073 = vmatpush1.bf16.msra.mxu0 %v1052
        %1074 = vmatprep.subr.bf16.mxu0 0
        %1075 = vmatpush1.bf16.msra.mxu0 %v1053
        %1076 = vmatprep.subr.bf16.mxu0 0
        %1077 = vmatpush1.bf16.msra.mxu0 %v1054
        %1078 = vmatprep.subr.bf16.mxu0 0
        %1079 = vmatpush1.bf16.msra.mxu0 %v1055
        %1080 = vmatprep.subr.bf16.mxu0 0
        %1081 = vmatpush1.bf16.msra.mxu0 0
        %1082 = vmatprep.subr.bf16.mxu0 0
        %1083 = vmatpush1.bf16.msra.mxu0 0
        %1084 = vmatprep.subr.bf16.mxu0 0
        %1085 = vmatpush1.bf16.msra.mxu0 0
        %1086 = vmatprep.subr.bf16.mxu0 0
        %1087 = vmatpush1.bf16.msra.mxu0 0
        %1088 = vmatprep.subr.bf16.mxu0 0
        %1089 = vmatpush1.bf16.msra.mxu0 0
        %1090 = vmatprep.subr.bf16.mxu0 0
        %1091 = vmatpush1.bf16.msra.mxu0 0
        %1092 = vmatprep.subr.bf16.mxu0 0
        %1093 = vmatpush1.bf16.msra.mxu0 0
        %1094 = vmatprep.subr.bf16.mxu0 0
        %1095 = vmatpush1.bf16.msra.mxu0 0
        %1096 = vmatprep.mubr.bf16.mxu0 0
        %1097 = vmatmul.mubr.bf16.gmra.mrb[0].mxu0 %v997
        %v1098 = vpop.f32.mrb[0].mxu0
        %v1099 = vadd.f32 0.0, %v1098
        %v1100 = vpop.f32.mrb[0].mxu0
        %v1101 = vpop.f32.mrb[0].mxu0
        %v1102 = vadd.f32 0.0, %v1101
        %v1103 = vpop.f32.mrb[0].mxu0
        %1104 = vmatprep.mubr.bf16.mxu0 0
        %1105 = vmatmul.mubr.bf16.gmra.mrb[0].mxu0 %v998
        %v1106 = vpop.f32.mrb[0].mxu0
        %v1107 = vadd.f32 0.0, %v1106
        %v1108 = vpop.f32.mrb[0].mxu0
        %v1109 = vpop.f32.mrb[0].mxu0
        %v1110 = vadd.f32 0.0, %v1109
        %v1111 = vpop.f32.mrb[0].mxu0
        %1112 = vdwg.mxu0
        %v1113 = vadd.f32 %v969, %v1099
        %v1114 = vadd.f32 %v972, %v1102
        %v1115 = vadd.f32 %v977, %v1107
        %v1116 = vadd.f32 %v980, %v1110
        %v1117 = vadd.f32 %v1113, %v1114
        %v1118 = vadd.f32 %v1117, %v1115
        %v1119 = vadd.f32 %v1118, %v1116
        %v1120 = vrot.slane %v1119, 4
        %v1121 = vadd.f32 %v1119, %v1120
        %v1122 = vrot.slane %v1121, 2
        %v1123 = vadd.f32 %v1121, %v1122
        %v1124 = vrot.slane %v1123, 1
        %v1125 = vadd.f32 %v1123, %v1124
        %v1126 = vmul.f32 %v1125, %v679
        %v1127 = vsub.f32 %v1113, %v1126
        %v1128 = vsub.f32 %v1114, %v1126
        %v1129 = vsub.f32 %v1115, %v1126
        %v1130 = vsub.f32 %v1116, %v1126
        %v1131 = vmul.f32 %v1127, %v1127
        %v1132 = vmul.f32 %v1128, %v1128
        %v1133 = vmul.f32 %v1129, %v1129
        %v1134 = vmul.f32 %v1130, %v1130
        %v1135 = vadd.f32 %v1131, %v1132
        %v1136 = vadd.f32 %v1135, %v1133
        %v1137 = vadd.f32 %v1136, %v1134
        %v1138 = vrot.slane %v1137, 4
        %v1139 = vadd.f32 %v1137, %v1138
        %v1140 = vrot.slane %v1139, 2
        %v1141 = vadd.f32 %v1139, %v1140
        %v1142 = vrot.slane %v1141, 1
        %v1143 = vadd.f32 %v1141, %v1142
        %v1144 = vmul.f32 %v1143, %v679
        %v1145 = vadd.f32 %v1144, 1e-05
        %v1146 = vrsqrt.pop %v1145
        %v1147 = vmul.f32 %v282, %v1146
        %v1148 = vlaneseq
        %v1149 = vshrl.u32 %v1148, 7
        %v1150 = vsub.s32 2, %v1149
        %v1151 = vrot.slane %v1147, %v1150
        %v1152 = vmul.f32 %v1127, %v1151
        %v1153 = vmul.f32 %v1128, %v1151
        %v1154 = vmul.f32 %v1129, %v1151
        %v1155 = vmul.f32 %v1130, %v1151
        %v1156 = vlaneseq
        %v1157 = vshrl.u32 %v1156, 7
        %v1158 = vsub.s32 3, %v1157
        %v1159 = vrot.slane %v282, %v1158
        %v1160 = vadd.f32 %v1152, %v1159
        %v1161 = vadd.f32 %v1153, %v1159
        %v1162 = vadd.f32 %v1154, %v1159
        %v1163 = vadd.f32 %v1155, %v1159
        %v1164 = vadd.f32 %v1160, %v310
        %v1165 = vadd.f32 %v1161, %v312
        %v1166 = vadd.f32 %v1162, %v315
        %v1167 = vadd.f32 %v1163, %v317
        %v1168 = vmax.f32 %v1164, 0.0
        %v1169 = vmax.f32 %v1165, 0.0
        %v1170 = vmax.f32 %v1166, 0.0
        %v1171 = vmax.f32 %v1167, 0.0
        %1172 = vst [vmem:[#allocation2 + $0x1] sm:$0xff] %v1168
        %1173 = vst [vmem:[#allocation2 + $0x9] sm:$0xff] %v1169
        %1174 = vst [vmem:[#allocation2 + $0x19] sm:$0xff] %v1170
        %1175 = vst [vmem:[#allocation2 + $0x21] sm:$0xff] %v1171
        %p1176 = scmp.eq.s32.totalorder %s22, 1
        // Predicated region
        $region49: #{res_conv1d_block_forward.1} parent=31 // pred_check
          %p1177 = pneg %p1176
        $region50: #{res_conv1d_block_forward.1} parent=31 // pred_check_branch
          %1179 = sbr.rel (%p1177) target = $region52
        $region51: #{res_conv1d_block_forward.1} parent=31 // pred_region
          %1180 = vst [vmem:[#allocation11] sm:$0xff] %v1168
          %1181 = vst [vmem:[#allocation11 + $0x8] sm:$0xff] %v1169
          %1182 = vst [vmem:[#allocation11 + $0x10] sm:$0xff] %v1170
          %1183 = vst [vmem:[#allocation11 + $0x18] sm:$0xff] %v1171
        $region52: #{res_conv1d_block_forward.1} parent=31 // pred_fallthru
          _
        // Predicated region
        $region53: #{res_conv1d_block_forward.1} parent=31 // pred_check
          %p1184 = pneg %p113
        $region54: #{res_conv1d_block_forward.1} parent=31 // pred_check_branch
          %1186 = sbr.rel (%p1184) target = $region56
        $region55: #{res_conv1d_block_forward.1} parent=31 // pred_region
          %s1188 = ssub.s32 512, 512
          %1189 = vsyncadd [#allocation7], %s1188
          %s1190 = sshll.u32 [#allocation11], 4
          %s1191 = int_to_ptr.vmem [resolvable:$true] %s1190
          %1196 = dma.vmem_to_hbm [thread:$0]  %s1191, 512, %s4, [#allocation7], 128, 128, 8
        $region56: #{res_conv1d_block_forward.1} parent=31 // pred_fallthru
          _
        // Predicated region
        $region57: #{res_conv1d_block_forward.1} parent=31 // pred_check
          %p1197 = pneg %p113
        $region58: #{res_conv1d_block_forward.1} parent=31 // pred_check_branch
          %1199 = sbr.rel (%p1197) target = $region60
        $region59: #{res_conv1d_block_forward.1} parent=31 // pred_region
          %1200 = dma.done [#allocation7], 512
        $region60: #{res_conv1d_block_forward.1} parent=31 // pred_fallthru
          _
      $region32: #{res_conv1d_block_forward.1} parent=5 // pred_fallthru
        _
      %p1201 = scmp.le.s32.totalorder 2, %s17
      // Predicated region
      $region61: #{res_conv1d_block_forward.1} parent=5 // pred_check
        %p1202 = pneg %p1201
      $region62: #{res_conv1d_block_forward.1} parent=5 // pred_check_branch
        %1204 = sbr.rel (%p1202) target = $region64
      $region63: #{res_conv1d_block_forward.1} parent=5 // pred_region
        %s1205 = ssub.s32 %s17, 2
      $region64: #{res_conv1d_block_forward.1} parent=5 // pred_fallthru
        _
    $region6: #{res_conv1d_block_forward.1} parent=1 // loop_footer
      %s21 = sadd.s32 1, %s17
    $region7: #{res_conv1d_block_forward.1} parent=1 // loop_footer_branch
      %16 = sbr.rel target = $region3
    $region8: #{res_conv1d_block_forward.1} parent=1 // loop_exit
      _
    %1206 = vsyncpa [#allocation6], 1
    %s1207 = scalar_lea.sflag [#allocation6], 1
    %1208 = vsyncpa %s1207, 1
    %1209 = vsyncpa [#allocation9], 1
    %s1210 = scalar_lea.sflag [#allocation9], 1
    %1211 = vsyncpa %s1210, 1
    %1212 = vsyncpa [#allocation7], 1
    %s1213 = scalar_lea.sflag [#allocation7], 1
    %1214 = vsyncpa %s1213, 1
  %1215 = vsyncmov [#allocation4]
  %s1216 = vpop.sfrf %1215
  %p1217 = scmp.eq.s32.totalorder %s1216, 0
  %p1218 = pneg %p1217
  %1220 = shalt.err (%p1218)

</llo_original>
